<compile_context>
chip_gen: v7x
topology: tpu7x:2x2x1
jax: 0.10.0
libtpu: 0.0.40
codegen_flags: <defaults>
</compile_context>

<pallas_src>
import functools

import numpy as np
import jax
import jax.numpy as jnp
from jax.experimental import pallas as pl
from jax.experimental.pallas import tpu as pltpu


def _round_up(x, m):
    return (x + m - 1) // m * m


def _conv_im2col_kernel(x_ref, w_ref, b_ref, o_ref, slab_ref, *,
                        kh, kw, cin_p, toh, sh, ow_pad, activation):
    """One grid step = TOH output rows of one image.

    x_ref   : (1, Hp_tot, Cin_p, Wx)    padded image (whole H resident in VMEM)
    w_ref   : (Cout_p, Cin_p*KH*KW)     packed weights (resident)
    b_ref   : (Cout_p, 1)               f32 bias
    o_ref   : (1, Cout_p, TOH*OW_pad)   lane-dense flat output slab
    slab_ref: (Cin_p*KH*KW, TOH*OW_pad) VMEM im2col scratch
    """
    t = pl.program_id(1)
    row0 = t * (toh * sh)                      # first input row for this row tile

    # Build the im2col slab: row (i*KW + j)*Cin_p + c, column r*OW_pad + ow holds
    # x[c, row0 + r*sh + i, ow + j].  Stores are 8/128-aligned; the only lane
    # shift is the tap offset j < KW on the source.
    for r in range(toh):
        c0 = r * ow_pad
        for i in range(kh):
            src = x_ref[0, row0 + r * sh + i]  # (Cin_p, Wx) row tile
            for j in range(kw):
                k0 = (i * kw + j) * cin_p
                slab_ref[k0:k0 + cin_p, c0:c0 + ow_pad] = src[:, j:j + ow_pad]

    # Single MXU matmul: the KH*KW tap accumulation lives in the contraction dim.
    acc = jnp.dot(w_ref[...], slab_ref[...], preferred_element_type=jnp.float32)
    acc = acc + b_ref[...]                     # f32 bias, broadcast over lanes
    # NOTE: padded rows/columns also pass through `activation` before the wrapper
    # crops them; harmless for identity / ReLU-style activations.
    o_ref[0] = activation(acc).astype(o_ref.dtype)


def conv2d_pallas(x, W, b, stride=(1, 1), padding=0, activation=lambda u: u,
                  compute_dtype=jnp.bfloat16, row_tile=8):
    """F.conv2d(x, W, b, stride, padding) followed by `activation`, NCHW in/out."""
    N, Cin, H, Wd = x.shape
    Cout, Cin_w, KH, KW = W.shape
    assert Cin_w == Cin, "groups != 1 not supported"
    sh, sw = (stride, stride) if isinstance(stride, int) else tuple(stride)
    ph, pw = (padding if isinstance(padding, (tuple, list)) else (padding, padding))

    Hp, Wp = H + 2 * ph, Wd + 2 * pw
    OH = (Hp - KH) // sh + 1                   # final output rows (height stride in-kernel)
    OW1 = Wp - KW + 1                          # stride-1 output cols computed in-kernel
    OW = (Wp - KW) // sw + 1                   # final output cols
    assert OH >= 1 and OW >= 1

    cdtype = x.dtype if compute_dtype is None else compute_dtype

    Cin_p = _round_up(Cin, 8)                  # sublane-align the contraction channels
    Cout_p = _round_up(Cout, 8)                # sublane-align the output channels
    K_p = KH * KW * Cin_p                      # folded contraction length

    TOH = max(1, min(row_tile, OH))            # output rows per grid step
    OH_pad = _round_up(OH, TOH)
    n_tiles = OH_pad // TOH
    OW_pad = _round_up(OW1, 128)               # lane-dense output width
    Wx = max(Wp, OW_pad + KW - 1)              # padded input width (covers tap j + OW_pad)
    Hp_tot = max(Hp, (OH_pad - 1) * sh + KH)   # padded input height (covers last row tile)

    # Single wrapper-side transpose + pad: (N,Cin,H,W) -> (N, Hp_tot, Cin_p, Wx).
    xt = jnp.transpose(x, (0, 2, 1, 3))
    xt = jnp.pad(xt, ((0, 0),
                      (ph, Hp_tot - H - ph),
                      (0, Cin_p - Cin),
                      (pw, Wx - Wd - pw))).astype(cdtype)

    # Pack weights once as (Cout_p, K_p), K ordered as (i, j, c) to match the slab.
    w2 = jnp.transpose(W, (0, 2, 3, 1))                                # (Cout, KH, KW, Cin)
    w2 = jnp.pad(w2, ((0, Cout_p - Cout), (0, 0), (0, 0), (0, Cin_p - Cin)))
    w2 = w2.reshape(Cout_p, K_p).astype(cdtype)
    b2 = jnp.pad(b, (0, Cout_p - Cout)).reshape(Cout_p, 1).astype(jnp.float32)

    kernel = functools.partial(_conv_im2col_kernel, kh=KH, kw=KW, cin_p=Cin_p,
                               toh=TOH, sh=sh, ow_pad=OW_pad, activation=activation)

    out_flat = pl.pallas_call(
        kernel,
        out_shape=jax.ShapeDtypeStruct((N, Cout_p, OH_pad * OW_pad), x.dtype),
        grid_spec=pltpu.PrefetchScalarGridSpec(
            num_scalar_prefetch=0,
            grid=(N, n_tiles),
            in_specs=[
                # Whole padded image resident per n (constant across row tiles -> no re-DMA).
                pl.BlockSpec((1, Hp_tot, Cin_p, Wx), lambda n, t: (n, 0, 0, 0)),
                pl.BlockSpec((Cout_p, K_p), lambda n, t: (0, 0)),       # resident weights
                pl.BlockSpec((Cout_p, 1), lambda n, t: (0, 0)),         # resident bias
            ],
            out_specs=pl.BlockSpec((1, Cout_p, TOH * OW_pad), lambda n, t: (n, 0, t)),
            scratch_shapes=[pltpu.VMEM((K_p, TOH * OW_pad), cdtype)],
        ),
        compiler_params=pltpu.CompilerParams(
            dimension_semantics=("parallel", "parallel"),
            vmem_limit_bytes=32 * 1024 * 1024,
        ),
    )(xt, w2, b2)

    # Free reshape (contiguous), then crop padded channels / rows / columns.
    out = out_flat.reshape(N, Cout_p, OH_pad, OW_pad)[:, :Cout, :OH, :OW1]
    if sw != 1:
        # TODO(synk): compute only strided columns in the slab build instead of subsampling.
        out = out[:, :, :, ::sw]
    assert out.shape == (N, Cout, OH, OW)
    return out


class ConvPallas:
    """Mirror of the PyTorch Conv module (deterministic init, identity activation)."""

    def __init__(self, filter_shape, function=lambda u: u, stride=(1, 1), padding=0,
                 compute_dtype=jnp.bfloat16):
        rng = np.random.RandomState(1234)
        fan_in = filter_shape[1] * filter_shape[2] * filter_shape[3]
        self.W = jnp.asarray(
            rng.normal(0, np.sqrt(2.0 / fan_in), size=filter_shape).astype("float32"))
        self.b = jnp.zeros((filter_shape[0],), dtype=jnp.float32)
        self.function = function
        self.stride = stride
        self.padding = padding
        self.compute_dtype = compute_dtype

    def __call__(self, x):
        return conv2d_pallas(x, self.W, self.b, stride=self.stride,
                             padding=self.padding, activation=self.function,
                             compute_dtype=self.compute_dtype)


if __name__ == "__main__":
    # Small shapes consistent with the module: batch=2, Cin=4, spatial=16x16,
    # filter_shape=(Cout=8, Cin=4, KH=3, KW=3), stride=(1,1), padding=1.
    key = jax.random.PRNGKey(0)
    x = jax.random.normal(key, (2, 4, 16, 16), dtype=jnp.float32)

    conv = ConvPallas(filter_shape=(8, 4, 3, 3), function=lambda u: u,
                      stride=(1, 1), padding=1)

    # Default path: bf16 streamed operands, f32 accumulation.
    y = jax.block_until_ready(conv(x))
    assert y.shape == (2, 8, 16, 16)

    # Reference (same NCHW/OIHW semantics as F.conv2d).
    y_ref = jax.lax.conv_general_dilated(
        x, conv.W, window_strides=(1, 1), padding=[(1, 1), (1, 1)],
        dimension_numbers=("NCHW", "OIHW", "NCHW"),
    ) + conv.b.reshape(1, -1, 1, 1)
    np.testing.assert_allclose(np.asarray(y), np.asarray(y_ref), rtol=5e-2, atol=5e-2)

    # f32-parity mode (exact numerics vs the PyTorch module).
    y32 = jax.block_until_ready(
        conv2d_pallas(x, conv.W, conv.b, stride=(1, 1), padding=1,
                      activation=lambda u: u, compute_dtype=jnp.float32))
    np.testing.assert_allclose(np.asarray(y32), np.asarray(y_ref), rtol=1e-4, atol=1e-4)

    print("KERNEL_OK")
</pallas_src>

<mosaic_0001>
module attributes {stable_mosaic.version = 11 : i64} {
  func.func @_conv_im2col_kernel(%arg0: i32, %arg1: i32, %arg2: memref<1x18x8x130xbf16, #tpu.memory_space<vmem>>, %arg3: memref<8x72xbf16, #tpu.memory_space<vmem>>, %arg4: memref<8x1xf32, #tpu.memory_space<vmem>>, %arg5: memref<1x8x1024xf32, #tpu.memory_space<vmem>>, %arg6: memref<72x1024xbf16, #tpu.memory_space<vmem>>) attributes {dimension_semantics = [#tpu.dimension_semantics<parallel>, #tpu.dimension_semantics<parallel>], iteration_bounds = array<i64: 2, 2>, scalar_prefetch = 0 : i64, scratch_operands = 1 : i64, tpu.core_type = #tpu.core_type<tc>, window_params = [{transform_indices = @transform_0, window_bounds = array<i64: 1, 18, 8, 130>}, {pipeline_mode = #tpu.pipeline_mode<synchronous>, transform_indices = @transform_1, window_bounds = array<i64: 8, 72>}, {pipeline_mode = #tpu.pipeline_mode<synchronous>, transform_indices = @transform_2, window_bounds = array<i64: 8, 1>}, {transform_indices = @transform_3, window_bounds = array<i64: 1, 8, 1024>}]} {
    %c8_i32 = arith.constant 8 : i32
    %0 = arith.muli %arg1, %c8_i32 : i32
    %c0_i32 = arith.constant 0 : i32
    %1 = arith.addi %0, %c0_i32 : i32
    %c0_i32_0 = arith.constant 0 : i32
    %2 = arith.addi %1, %c0_i32_0 : i32
    %c0 = arith.constant 0 : index
    %3 = arith.index_cast %2 : i32 to index
    %c0_1 = arith.constant 0 : index
    %c0_2 = arith.constant 0 : index
    %4 = vector.load %arg2[%c0, %3, %c0_1, %c0_2] : memref<1x18x8x130xbf16, #tpu.memory_space<vmem>>, vector<1x1x8x130xbf16>
    %5 = vector.shape_cast %4 : vector<1x1x8x130xbf16> to vector<8x130xbf16>
    %6 = vector.extract_strided_slice %5 {offsets = [0, 0], sizes = [8, 128], strides = [1, 1]} : vector<8x130xbf16> to vector<8x128xbf16>
    %c0_3 = arith.constant 0 : index
    %c0_4 = arith.constant 0 : index
    %7 = vector.load %arg6[%c0_3, %c0_4] : memref<72x1024xbf16, #tpu.memory_space<vmem>>, vector<8x128xbf16>
    tpu.vector_store %arg6[%c0_3, %c0_4], %6 {strides = array<i32>} : memref<72x1024xbf16, #tpu.memory_space<vmem>>, vector<8x128xbf16>,
    %8 = vector.extract_strided_slice %5 {offsets = [0, 1], sizes = [8, 128], strides = [1, 1]} : vector<8x130xbf16> to vector<8x128xbf16>
    %c8 = arith.constant 8 : index
    %c0_5 = arith.constant 0 : index
    %9 = vector.load %arg6[%c8, %c0_5] : memref<72x1024xbf16, #tpu.memory_space<vmem>>, vector<8x128xbf16>
    tpu.vector_store %arg6[%c8, %c0_5], %8 {strides = array<i32>} : memref<72x1024xbf16, #tpu.memory_space<vmem>>, vector<8x128xbf16>,
    %10 = vector.extract_strided_slice %5 {offsets = [0, 2], sizes = [8, 128], strides = [1, 1]} : vector<8x130xbf16> to vector<8x128xbf16>
    %c16 = arith.constant 16 : index
    %c0_6 = arith.constant 0 : index
    %11 = vector.load %arg6[%c16, %c0_6] : memref<72x1024xbf16, #tpu.memory_space<vmem>>, vector<8x128xbf16>
    tpu.vector_store %arg6[%c16, %c0_6], %10 {strides = array<i32>} : memref<72x1024xbf16, #tpu.memory_space<vmem>>, vector<8x128xbf16>,
    %c0_i32_7 = arith.constant 0 : i32
    %12 = arith.addi %0, %c0_i32_7 : i32
    %c1_i32 = arith.constant 1 : i32
    %13 = arith.addi %12, %c1_i32 : i32
    %c0_8 = arith.constant 0 : index
    %14 = arith.index_cast %13 : i32 to index
    %c0_9 = arith.constant 0 : index
    %c0_10 = arith.constant 0 : index
    %15 = vector.load %arg2[%c0_8, %14, %c0_9, %c0_10] : memref<1x18x8x130xbf16, #tpu.memory_space<vmem>>, vector<1x1x8x130xbf16>
    %16 = vector.shape_cast %15 : vector<1x1x8x130xbf16> to vector<8x130xbf16>
    %17 = vector.extract_strided_slice %16 {offsets = [0, 0], sizes = [8, 128], strides = [1, 1]} : vector<8x130xbf16> to vector<8x128xbf16>
    %c24 = arith.constant 24 : index
    %c0_11 = arith.constant 0 : index
    %18 = vector.load %arg6[%c24, %c0_11] : memref<72x1024xbf16, #tpu.memory_space<vmem>>, vector<8x128xbf16>
    tpu.vector_store %arg6[%c24, %c0_11], %17 {strides = array<i32>} : memref<72x1024xbf16, #tpu.memory_space<vmem>>, vector<8x128xbf16>,
    %19 = vector.extract_strided_slice %16 {offsets = [0, 1], sizes = [8, 128], strides = [1, 1]} : vector<8x130xbf16> to vector<8x128xbf16>
    %c32 = arith.constant 32 : index
    %c0_12 = arith.constant 0 : index
    %20 = vector.load %arg6[%c32, %c0_12] : memref<72x1024xbf16, #tpu.memory_space<vmem>>, vector<8x128xbf16>
    tpu.vector_store %arg6[%c32, %c0_12], %19 {strides = array<i32>} : memref<72x1024xbf16, #tpu.memory_space<vmem>>, vector<8x128xbf16>,
    %21 = vector.extract_strided_slice %16 {offsets = [0, 2], sizes = [8, 128], strides = [1, 1]} : vector<8x130xbf16> to vector<8x128xbf16>
    %c40 = arith.constant 40 : index
    %c0_13 = arith.constant 0 : index
    %22 = vector.load %arg6[%c40, %c0_13] : memref<72x1024xbf16, #tpu.memory_space<vmem>>, vector<8x128xbf16>
    tpu.vector_store %arg6[%c40, %c0_13], %21 {strides = array<i32>} : memref<72x1024xbf16, #tpu.memory_space<vmem>>, vector<8x128xbf16>,
    %c0_i32_14 = arith.constant 0 : i32
    %23 = arith.addi %0, %c0_i32_14 : i32
    %c2_i32 = arith.constant 2 : i32
    %24 = arith.addi %23, %c2_i32 : i32
    %c0_15 = arith.constant 0 : index
    %25 = arith.index_cast %24 : i32 to index
    %c0_16 = arith.constant 0 : index
    %c0_17 = arith.constant 0 : index
    %26 = vector.load %arg2[%c0_15, %25, %c0_16, %c0_17] : memref<1x18x8x130xbf16, #tpu.memory_space<vmem>>, vector<1x1x8x130xbf16>
    %27 = vector.shape_cast %26 : vector<1x1x8x130xbf16> to vector<8x130xbf16>
    %28 = vector.extract_strided_slice %27 {offsets = [0, 0], sizes = [8, 128], strides = [1, 1]} : vector<8x130xbf16> to vector<8x128xbf16>
    %c48 = arith.constant 48 : index
    %c0_18 = arith.constant 0 : index
    %29 = vector.load %arg6[%c48, %c0_18] : memref<72x1024xbf16, #tpu.memory_space<vmem>>, vector<8x128xbf16>
    tpu.vector_store %arg6[%c48, %c0_18], %28 {strides = array<i32>} : memref<72x1024xbf16, #tpu.memory_space<vmem>>, vector<8x128xbf16>,
    %30 = vector.extract_strided_slice %27 {offsets = [0, 1], sizes = [8, 128], strides = [1, 1]} : vector<8x130xbf16> to vector<8x128xbf16>
    %c56 = arith.constant 56 : index
    %c0_19 = arith.constant 0 : index
    %31 = vector.load %arg6[%c56, %c0_19] : memref<72x1024xbf16, #tpu.memory_space<vmem>>, vector<8x128xbf16>
    tpu.vector_store %arg6[%c56, %c0_19], %30 {strides = array<i32>} : memref<72x1024xbf16, #tpu.memory_space<vmem>>, vector<8x128xbf16>,
    %32 = vector.extract_strided_slice %27 {offsets = [0, 2], sizes = [8, 128], strides = [1, 1]} : vector<8x130xbf16> to vector<8x128xbf16>
    %c64 = arith.constant 64 : index
    %c0_20 = arith.constant 0 : index
    %33 = vector.load %arg6[%c64, %c0_20] : memref<72x1024xbf16, #tpu.memory_space<vmem>>, vector<8x128xbf16>
    tpu.vector_store %arg6[%c64, %c0_20], %32 {strides = array<i32>} : memref<72x1024xbf16, #tpu.memory_space<vmem>>, vector<8x128xbf16>,
    %c1_i32_21 = arith.constant 1 : i32
    %34 = arith.addi %0, %c1_i32_21 : i32
    %c0_i32_22 = arith.constant 0 : i32
    %35 = arith.addi %34, %c0_i32_22 : i32
    %c0_23 = arith.constant 0 : index
    %36 = arith.index_cast %35 : i32 to index
    %c0_24 = arith.constant 0 : index
    %c0_25 = arith.constant 0 : index
    %37 = vector.load %arg2[%c0_23, %36, %c0_24, %c0_25] : memref<1x18x8x130xbf16, #tpu.memory_space<vmem>>, vector<1x1x8x130xbf16>
    %38 = vector.shape_cast %37 : vector<1x1x8x130xbf16> to vector<8x130xbf16>
    %39 = vector.extract_strided_slice %38 {offsets = [0, 0], sizes = [8, 128], strides = [1, 1]} : vector<8x130xbf16> to vector<8x128xbf16>
    %c0_26 = arith.constant 0 : index
    %c128 = arith.constant 128 : index
    %40 = vector.load %arg6[%c0_26, %c128] : memref<72x1024xbf16, #tpu.memory_space<vmem>>, vector<8x128xbf16>
    tpu.vector_store %arg6[%c0_26, %c128], %39 {strides = array<i32>} : memref<72x1024xbf16, #tpu.memory_space<vmem>>, vector<8x128xbf16>,
    %41 = vector.extract_strided_slice %38 {offsets = [0, 1], sizes = [8, 128], strides = [1, 1]} : vector<8x130xbf16> to vector<8x128xbf16>
    %c8_27 = arith.constant 8 : index
    %c128_28 = arith.constant 128 : index
    %42 = vector.load %arg6[%c8_27, %c128_28] : memref<72x1024xbf16, #tpu.memory_space<vmem>>, vector<8x128xbf16>
    tpu.vector_store %arg6[%c8_27, %c128_28], %41 {strides = array<i32>} : memref<72x1024xbf16, #tpu.memory_space<vmem>>, vector<8x128xbf16>,
    %43 = vector.extract_strided_slice %38 {offsets = [0, 2], sizes = [8, 128], strides = [1, 1]} : vector<8x130xbf16> to vector<8x128xbf16>
    %c16_29 = arith.constant 16 : index
    %c128_30 = arith.constant 128 : index
    %44 = vector.load %arg6[%c16_29, %c128_30] : memref<72x1024xbf16, #tpu.memory_space<vmem>>, vector<8x128xbf16>
    tpu.vector_store %arg6[%c16_29, %c128_30], %43 {strides = array<i32>} : memref<72x1024xbf16, #tpu.memory_space<vmem>>, vector<8x128xbf16>,
    %c1_i32_31 = arith.constant 1 : i32
    %45 = arith.addi %0, %c1_i32_31 : i32
    %c1_i32_32 = arith.constant 1 : i32
    %46 = arith.addi %45, %c1_i32_32 : i32
    %c0_33 = arith.constant 0 : index
    %47 = arith.index_cast %46 : i32 to index
    %c0_34 = arith.constant 0 : index
    %c0_35 = arith.constant 0 : index
    %48 = vector.load %arg2[%c0_33, %47, %c0_34, %c0_35] : memref<1x18x8x130xbf16, #tpu.memory_space<vmem>>, vector<1x1x8x130xbf16>
    %49 = vector.shape_cast %48 : vector<1x1x8x130xbf16> to vector<8x130xbf16>
    %50 = vector.extract_strided_slice %49 {offsets = [0, 0], sizes = [8, 128], strides = [1, 1]} : vector<8x130xbf16> to vector<8x128xbf16>
    %c24_36 = arith.constant 24 : index
    %c128_37 = arith.constant 128 : index
    %51 = vector.load %arg6[%c24_36, %c128_37] : memref<72x1024xbf16, #tpu.memory_space<vmem>>, vector<8x128xbf16>
    tpu.vector_store %arg6[%c24_36, %c128_37], %50 {strides = array<i32>} : memref<72x1024xbf16, #tpu.memory_space<vmem>>, vector<8x128xbf16>,
    %52 = vector.extract_strided_slice %49 {offsets = [0, 1], sizes = [8, 128], strides = [1, 1]} : vector<8x130xbf16> to vector<8x128xbf16>
    %c32_38 = arith.constant 32 : index
    %c128_39 = arith.constant 128 : index
    %53 = vector.load %arg6[%c32_38, %c128_39] : memref<72x1024xbf16, #tpu.memory_space<vmem>>, vector<8x128xbf16>
    tpu.vector_store %arg6[%c32_38, %c128_39], %52 {strides = array<i32>} : memref<72x1024xbf16, #tpu.memory_space<vmem>>, vector<8x128xbf16>,
    %54 = vector.extract_strided_slice %49 {offsets = [0, 2], sizes = [8, 128], strides = [1, 1]} : vector<8x130xbf16> to vector<8x128xbf16>
    %c40_40 = arith.constant 40 : index
    %c128_41 = arith.constant 128 : index
    %55 = vector.load %arg6[%c40_40, %c128_41] : memref<72x1024xbf16, #tpu.memory_space<vmem>>, vector<8x128xbf16>
    tpu.vector_store %arg6[%c40_40, %c128_41], %54 {strides = array<i32>} : memref<72x1024xbf16, #tpu.memory_space<vmem>>, vector<8x128xbf16>,
    %c1_i32_42 = arith.constant 1 : i32
    %56 = arith.addi %0, %c1_i32_42 : i32
    %c2_i32_43 = arith.constant 2 : i32
    %57 = arith.addi %56, %c2_i32_43 : i32
    %c0_44 = arith.constant 0 : index
    %58 = arith.index_cast %57 : i32 to index
    %c0_45 = arith.constant 0 : index
    %c0_46 = arith.constant 0 : index
    %59 = vector.load %arg2[%c0_44, %58, %c0_45, %c0_46] : memref<1x18x8x130xbf16, #tpu.memory_space<vmem>>, vector<1x1x8x130xbf16>
    %60 = vector.shape_cast %59 : vector<1x1x8x130xbf16> to vector<8x130xbf16>
    %61 = vector.extract_strided_slice %60 {offsets = [0, 0], sizes = [8, 128], strides = [1, 1]} : vector<8x130xbf16> to vector<8x128xbf16>
    %c48_47 = arith.constant 48 : index
    %c128_48 = arith.constant 128 : index
    %62 = vector.load %arg6[%c48_47, %c128_48] : memref<72x1024xbf16, #tpu.memory_space<vmem>>, vector<8x128xbf16>
    tpu.vector_store %arg6[%c48_47, %c128_48], %61 {strides = array<i32>} : memref<72x1024xbf16, #tpu.memory_space<vmem>>, vector<8x128xbf16>,
    %63 = vector.extract_strided_slice %60 {offsets = [0, 1], sizes = [8, 128], strides = [1, 1]} : vector<8x130xbf16> to vector<8x128xbf16>
    %c56_49 = arith.constant 56 : index
    %c128_50 = arith.constant 128 : index
    %64 = vector.load %arg6[%c56_49, %c128_50] : memref<72x1024xbf16, #tpu.memory_space<vmem>>, vector<8x128xbf16>
    tpu.vector_store %arg6[%c56_49, %c128_50], %63 {strides = array<i32>} : memref<72x1024xbf16, #tpu.memory_space<vmem>>, vector<8x128xbf16>,
    %65 = vector.extract_strided_slice %60 {offsets = [0, 2], sizes = [8, 128], strides = [1, 1]} : vector<8x130xbf16> to vector<8x128xbf16>
    %c64_51 = arith.constant 64 : index
    %c128_52 = arith.constant 128 : index
    %66 = vector.load %arg6[%c64_51, %c128_52] : memref<72x1024xbf16, #tpu.memory_space<vmem>>, vector<8x128xbf16>
    tpu.vector_store %arg6[%c64_51, %c128_52], %65 {strides = array<i32>} : memref<72x1024xbf16, #tpu.memory_space<vmem>>, vector<8x128xbf16>,
    %c2_i32_53 = arith.constant 2 : i32
    %67 = arith.addi %0, %c2_i32_53 : i32
    %c0_i32_54 = arith.constant 0 : i32
    %68 = arith.addi %67, %c0_i32_54 : i32
    %c0_55 = arith.constant 0 : index
    %69 = arith.index_cast %68 : i32 to index
    %c0_56 = arith.constant 0 : index
    %c0_57 = arith.constant 0 : index
    %70 = vector.load %arg2[%c0_55, %69, %c0_56, %c0_57] : memref<1x18x8x130xbf16, #tpu.memory_space<vmem>>, vector<1x1x8x130xbf16>
    %71 = vector.shape_cast %70 : vector<1x1x8x130xbf16> to vector<8x130xbf16>
    %72 = vector.extract_strided_slice %71 {offsets = [0, 0], sizes = [8, 128], strides = [1, 1]} : vector<8x130xbf16> to vector<8x128xbf16>
    %c0_58 = arith.constant 0 : index
    %c256 = arith.constant 256 : index
    %73 = vector.load %arg6[%c0_58, %c256] : memref<72x1024xbf16, #tpu.memory_space<vmem>>, vector<8x128xbf16>
    tpu.vector_store %arg6[%c0_58, %c256], %72 {strides = array<i32>} : memref<72x1024xbf16, #tpu.memory_space<vmem>>, vector<8x128xbf16>,
    %74 = vector.extract_strided_slice %71 {offsets = [0, 1], sizes = [8, 128], strides = [1, 1]} : vector<8x130xbf16> to vector<8x128xbf16>
    %c8_59 = arith.constant 8 : index
    %c256_60 = arith.constant 256 : index
    %75 = vector.load %arg6[%c8_59, %c256_60] : memref<72x1024xbf16, #tpu.memory_space<vmem>>, vector<8x128xbf16>
    tpu.vector_store %arg6[%c8_59, %c256_60], %74 {strides = array<i32>} : memref<72x1024xbf16, #tpu.memory_space<vmem>>, vector<8x128xbf16>,
    %76 = vector.extract_strided_slice %71 {offsets = [0, 2], sizes = [8, 128], strides = [1, 1]} : vector<8x130xbf16> to vector<8x128xbf16>
    %c16_61 = arith.constant 16 : index
    %c256_62 = arith.constant 256 : index
    %77 = vector.load %arg6[%c16_61, %c256_62] : memref<72x1024xbf16, #tpu.memory_space<vmem>>, vector<8x128xbf16>
    tpu.vector_store %arg6[%c16_61, %c256_62], %76 {strides = array<i32>} : memref<72x1024xbf16, #tpu.memory_space<vmem>>, vector<8x128xbf16>,
    %c2_i32_63 = arith.constant 2 : i32
    %78 = arith.addi %0, %c2_i32_63 : i32
    %c1_i32_64 = arith.constant 1 : i32
    %79 = arith.addi %78, %c1_i32_64 : i32
    %c0_65 = arith.constant 0 : index
    %80 = arith.index_cast %79 : i32 to index
    %c0_66 = arith.constant 0 : index
    %c0_67 = arith.constant 0 : index
    %81 = vector.load %arg2[%c0_65, %80, %c0_66, %c0_67] : memref<1x18x8x130xbf16, #tpu.memory_space<vmem>>, vector<1x1x8x130xbf16>
    %82 = vector.shape_cast %81 : vector<1x1x8x130xbf16> to vector<8x130xbf16>
    %83 = vector.extract_strided_slice %82 {offsets = [0, 0], sizes = [8, 128], strides = [1, 1]} : vector<8x130xbf16> to vector<8x128xbf16>
    %c24_68 = arith.constant 24 : index
    %c256_69 = arith.constant 256 : index
    %84 = vector.load %arg6[%c24_68, %c256_69] : memref<72x1024xbf16, #tpu.memory_space<vmem>>, vector<8x128xbf16>
    tpu.vector_store %arg6[%c24_68, %c256_69], %83 {strides = array<i32>} : memref<72x1024xbf16, #tpu.memory_space<vmem>>, vector<8x128xbf16>,
    %85 = vector.extract_strided_slice %82 {offsets = [0, 1], sizes = [8, 128], strides = [1, 1]} : vector<8x130xbf16> to vector<8x128xbf16>
    %c32_70 = arith.constant 32 : index
    %c256_71 = arith.constant 256 : index
    %86 = vector.load %arg6[%c32_70, %c256_71] : memref<72x1024xbf16, #tpu.memory_space<vmem>>, vector<8x128xbf16>
    tpu.vector_store %arg6[%c32_70, %c256_71], %85 {strides = array<i32>} : memref<72x1024xbf16, #tpu.memory_space<vmem>>, vector<8x128xbf16>,
    %87 = vector.extract_strided_slice %82 {offsets = [0, 2], sizes = [8, 128], strides = [1, 1]} : vector<8x130xbf16> to vector<8x128xbf16>
    %c40_72 = arith.constant 40 : index
    %c256_73 = arith.constant 256 : index
    %88 = vector.load %arg6[%c40_72, %c256_73] : memref<72x1024xbf16, #tpu.memory_space<vmem>>, vector<8x128xbf16>
    tpu.vector_store %arg6[%c40_72, %c256_73], %87 {strides = array<i32>} : memref<72x1024xbf16, #tpu.memory_space<vmem>>, vector<8x128xbf16>,
    %c2_i32_74 = arith.constant 2 : i32
    %89 = arith.addi %0, %c2_i32_74 : i32
    %c2_i32_75 = arith.constant 2 : i32
    %90 = arith.addi %89, %c2_i32_75 : i32
    %c0_76 = arith.constant 0 : index
    %91 = arith.index_cast %90 : i32 to index
    %c0_77 = arith.constant 0 : index
    %c0_78 = arith.constant 0 : index
    %92 = vector.load %arg2[%c0_76, %91, %c0_77, %c0_78] : memref<1x18x8x130xbf16, #tpu.memory_space<vmem>>, vector<1x1x8x130xbf16>
    %93 = vector.shape_cast %92 : vector<1x1x8x130xbf16> to vector<8x130xbf16>
    %94 = vector.extract_strided_slice %93 {offsets = [0, 0], sizes = [8, 128], strides = [1, 1]} : vector<8x130xbf16> to vector<8x128xbf16>
    %c48_79 = arith.constant 48 : index
    %c256_80 = arith.constant 256 : index
    %95 = vector.load %arg6[%c48_79, %c256_80] : memref<72x1024xbf16, #tpu.memory_space<vmem>>, vector<8x128xbf16>
    tpu.vector_store %arg6[%c48_79, %c256_80], %94 {strides = array<i32>} : memref<72x1024xbf16, #tpu.memory_space<vmem>>, vector<8x128xbf16>,
    %96 = vector.extract_strided_slice %93 {offsets = [0, 1], sizes = [8, 128], strides = [1, 1]} : vector<8x130xbf16> to vector<8x128xbf16>
    %c56_81 = arith.constant 56 : index
    %c256_82 = arith.constant 256 : index
    %97 = vector.load %arg6[%c56_81, %c256_82] : memref<72x1024xbf16, #tpu.memory_space<vmem>>, vector<8x128xbf16>
    tpu.vector_store %arg6[%c56_81, %c256_82], %96 {strides = array<i32>} : memref<72x1024xbf16, #tpu.memory_space<vmem>>, vector<8x128xbf16>,
    %98 = vector.extract_strided_slice %93 {offsets = [0, 2], sizes = [8, 128], strides = [1, 1]} : vector<8x130xbf16> to vector<8x128xbf16>
    %c64_83 = arith.constant 64 : index
    %c256_84 = arith.constant 256 : index
    %99 = vector.load %arg6[%c64_83, %c256_84] : memref<72x1024xbf16, #tpu.memory_space<vmem>>, vector<8x128xbf16>
    tpu.vector_store %arg6[%c64_83, %c256_84], %98 {strides = array<i32>} : memref<72x1024xbf16, #tpu.memory_space<vmem>>, vector<8x128xbf16>,
    %c3_i32 = arith.constant 3 : i32
    %100 = arith.addi %0, %c3_i32 : i32
    %c0_i32_85 = arith.constant 0 : i32
    %101 = arith.addi %100, %c0_i32_85 : i32
    %c0_86 = arith.constant 0 : index
    %102 = arith.index_cast %101 : i32 to index
    %c0_87 = arith.constant 0 : index
    %c0_88 = arith.constant 0 : index
    %103 = vector.load %arg2[%c0_86, %102, %c0_87, %c0_88] : memref<1x18x8x130xbf16, #tpu.memory_space<vmem>>, vector<1x1x8x130xbf16>
    %104 = vector.shape_cast %103 : vector<1x1x8x130xbf16> to vector<8x130xbf16>
    %105 = vector.extract_strided_slice %104 {offsets = [0, 0], sizes = [8, 128], strides = [1, 1]} : vector<8x130xbf16> to vector<8x128xbf16>
    %c0_89 = arith.constant 0 : index
    %c384 = arith.constant 384 : index
    %106 = vector.load %arg6[%c0_89, %c384] : memref<72x1024xbf16, #tpu.memory_space<vmem>>, vector<8x128xbf16>
    tpu.vector_store %arg6[%c0_89, %c384], %105 {strides = array<i32>} : memref<72x1024xbf16, #tpu.memory_space<vmem>>, vector<8x128xbf16>,
    %107 = vector.extract_strided_slice %104 {offsets = [0, 1], sizes = [8, 128], strides = [1, 1]} : vector<8x130xbf16> to vector<8x128xbf16>
    %c8_90 = arith.constant 8 : index
    %c384_91 = arith.constant 384 : index
    %108 = vector.load %arg6[%c8_90, %c384_91] : memref<72x1024xbf16, #tpu.memory_space<vmem>>, vector<8x128xbf16>
    tpu.vector_store %arg6[%c8_90, %c384_91], %107 {strides = array<i32>} : memref<72x1024xbf16, #tpu.memory_space<vmem>>, vector<8x128xbf16>,
    %109 = vector.extract_strided_slice %104 {offsets = [0, 2], sizes = [8, 128], strides = [1, 1]} : vector<8x130xbf16> to vector<8x128xbf16>
    %c16_92 = arith.constant 16 : index
    %c384_93 = arith.constant 384 : index
    %110 = vector.load %arg6[%c16_92, %c384_93] : memref<72x1024xbf16, #tpu.memory_space<vmem>>, vector<8x128xbf16>
    tpu.vector_store %arg6[%c16_92, %c384_93], %109 {strides = array<i32>} : memref<72x1024xbf16, #tpu.memory_space<vmem>>, vector<8x128xbf16>,
    %c3_i32_94 = arith.constant 3 : i32
    %111 = arith.addi %0, %c3_i32_94 : i32
    %c1_i32_95 = arith.constant 1 : i32
    %112 = arith.addi %111, %c1_i32_95 : i32
    %c0_96 = arith.constant 0 : index
    %113 = arith.index_cast %112 : i32 to index
    %c0_97 = arith.constant 0 : index
    %c0_98 = arith.constant 0 : index
    %114 = vector.load %arg2[%c0_96, %113, %c0_97, %c0_98] : memref<1x18x8x130xbf16, #tpu.memory_space<vmem>>, vector<1x1x8x130xbf16>
    %115 = vector.shape_cast %114 : vector<1x1x8x130xbf16> to vector<8x130xbf16>
    %116 = vector.extract_strided_slice %115 {offsets = [0, 0], sizes = [8, 128], strides = [1, 1]} : vector<8x130xbf16> to vector<8x128xbf16>
    %c24_99 = arith.constant 24 : index
    %c384_100 = arith.constant 384 : index
    %117 = vector.load %arg6[%c24_99, %c384_100] : memref<72x1024xbf16, #tpu.memory_space<vmem>>, vector<8x128xbf16>
    tpu.vector_store %arg6[%c24_99, %c384_100], %116 {strides = array<i32>} : memref<72x1024xbf16, #tpu.memory_space<vmem>>, vector<8x128xbf16>,
    %118 = vector.extract_strided_slice %115 {offsets = [0, 1], sizes = [8, 128], strides = [1, 1]} : vector<8x130xbf16> to vector<8x128xbf16>
    %c32_101 = arith.constant 32 : index
    %c384_102 = arith.constant 384 : index
    %119 = vector.load %arg6[%c32_101, %c384_102] : memref<72x1024xbf16, #tpu.memory_space<vmem>>, vector<8x128xbf16>
    tpu.vector_store %arg6[%c32_101, %c384_102], %118 {strides = array<i32>} : memref<72x1024xbf16, #tpu.memory_space<vmem>>, vector<8x128xbf16>,
    %120 = vector.extract_strided_slice %115 {offsets = [0, 2], sizes = [8, 128], strides = [1, 1]} : vector<8x130xbf16> to vector<8x128xbf16>
    %c40_103 = arith.constant 40 : index
    %c384_104 = arith.constant 384 : index
    %121 = vector.load %arg6[%c40_103, %c384_104] : memref<72x1024xbf16, #tpu.memory_space<vmem>>, vector<8x128xbf16>
    tpu.vector_store %arg6[%c40_103, %c384_104], %120 {strides = array<i32>} : memref<72x1024xbf16, #tpu.memory_space<vmem>>, vector<8x128xbf16>,
    %c3_i32_105 = arith.constant 3 : i32
    %122 = arith.addi %0, %c3_i32_105 : i32
    %c2_i32_106 = arith.constant 2 : i32
    %123 = arith.addi %122, %c2_i32_106 : i32
    %c0_107 = arith.constant 0 : index
    %124 = arith.index_cast %123 : i32 to index
    %c0_108 = arith.constant 0 : index
    %c0_109 = arith.constant 0 : index
    %125 = vector.load %arg2[%c0_107, %124, %c0_108, %c0_109] : memref<1x18x8x130xbf16, #tpu.memory_space<vmem>>, vector<1x1x8x130xbf16>
    %126 = vector.shape_cast %125 : vector<1x1x8x130xbf16> to vector<8x130xbf16>
    %127 = vector.extract_strided_slice %126 {offsets = [0, 0], sizes = [8, 128], strides = [1, 1]} : vector<8x130xbf16> to vector<8x128xbf16>
    %c48_110 = arith.constant 48 : index
    %c384_111 = arith.constant 384 : index
    %128 = vector.load %arg6[%c48_110, %c384_111] : memref<72x1024xbf16, #tpu.memory_space<vmem>>, vector<8x128xbf16>
    tpu.vector_store %arg6[%c48_110, %c384_111], %127 {strides = array<i32>} : memref<72x1024xbf16, #tpu.memory_space<vmem>>, vector<8x128xbf16>,
    %129 = vector.extract_strided_slice %126 {offsets = [0, 1], sizes = [8, 128], strides = [1, 1]} : vector<8x130xbf16> to vector<8x128xbf16>
    %c56_112 = arith.constant 56 : index
    %c384_113 = arith.constant 384 : index
    %130 = vector.load %arg6[%c56_112, %c384_113] : memref<72x1024xbf16, #tpu.memory_space<vmem>>, vector<8x128xbf16>
    tpu.vector_store %arg6[%c56_112, %c384_113], %129 {strides = array<i32>} : memref<72x1024xbf16, #tpu.memory_space<vmem>>, vector<8x128xbf16>,
    %131 = vector.extract_strided_slice %126 {offsets = [0, 2], sizes = [8, 128], strides = [1, 1]} : vector<8x130xbf16> to vector<8x128xbf16>
    %c64_114 = arith.constant 64 : index
    %c384_115 = arith.constant 384 : index
    %132 = vector.load %arg6[%c64_114, %c384_115] : memref<72x1024xbf16, #tpu.memory_space<vmem>>, vector<8x128xbf16>
    tpu.vector_store %arg6[%c64_114, %c384_115], %131 {strides = array<i32>} : memref<72x1024xbf16, #tpu.memory_space<vmem>>, vector<8x128xbf16>,
    %c4_i32 = arith.constant 4 : i32
    %133 = arith.addi %0, %c4_i32 : i32
    %c0_i32_116 = arith.constant 0 : i32
    %134 = arith.addi %133, %c0_i32_116 : i32
    %c0_117 = arith.constant 0 : index
    %135 = arith.index_cast %134 : i32 to index
    %c0_118 = arith.constant 0 : index
    %c0_119 = arith.constant 0 : index
    %136 = vector.load %arg2[%c0_117, %135, %c0_118, %c0_119] : memref<1x18x8x130xbf16, #tpu.memory_space<vmem>>, vector<1x1x8x130xbf16>
    %137 = vector.shape_cast %136 : vector<1x1x8x130xbf16> to vector<8x130xbf16>
    %138 = vector.extract_strided_slice %137 {offsets = [0, 0], sizes = [8, 128], strides = [1, 1]} : vector<8x130xbf16> to vector<8x128xbf16>
    %c0_120 = arith.constant 0 : index
    %c512 = arith.constant 512 : index
    %139 = vector.load %arg6[%c0_120, %c512] : memref<72x1024xbf16, #tpu.memory_space<vmem>>, vector<8x128xbf16>
    tpu.vector_store %arg6[%c0_120, %c512], %138 {strides = array<i32>} : memref<72x1024xbf16, #tpu.memory_space<vmem>>, vector<8x128xbf16>,
    %140 = vector.extract_strided_slice %137 {offsets = [0, 1], sizes = [8, 128], strides = [1, 1]} : vector<8x130xbf16> to vector<8x128xbf16>
    %c8_121 = arith.constant 8 : index
    %c512_122 = arith.constant 512 : index
    %141 = vector.load %arg6[%c8_121, %c512_122] : memref<72x1024xbf16, #tpu.memory_space<vmem>>, vector<8x128xbf16>
    tpu.vector_store %arg6[%c8_121, %c512_122], %140 {strides = array<i32>} : memref<72x1024xbf16, #tpu.memory_space<vmem>>, vector<8x128xbf16>,
    %142 = vector.extract_strided_slice %137 {offsets = [0, 2], sizes = [8, 128], strides = [1, 1]} : vector<8x130xbf16> to vector<8x128xbf16>
    %c16_123 = arith.constant 16 : index
    %c512_124 = arith.constant 512 : index
    %143 = vector.load %arg6[%c16_123, %c512_124] : memref<72x1024xbf16, #tpu.memory_space<vmem>>, vector<8x128xbf16>
    tpu.vector_store %arg6[%c16_123, %c512_124], %142 {strides = array<i32>} : memref<72x1024xbf16, #tpu.memory_space<vmem>>, vector<8x128xbf16>,
    %c4_i32_125 = arith.constant 4 : i32
    %144 = arith.addi %0, %c4_i32_125 : i32
    %c1_i32_126 = arith.constant 1 : i32
    %145 = arith.addi %144, %c1_i32_126 : i32
    %c0_127 = arith.constant 0 : index
    %146 = arith.index_cast %145 : i32 to index
    %c0_128 = arith.constant 0 : index
    %c0_129 = arith.constant 0 : index
    %147 = vector.load %arg2[%c0_127, %146, %c0_128, %c0_129] : memref<1x18x8x130xbf16, #tpu.memory_space<vmem>>, vector<1x1x8x130xbf16>
    %148 = vector.shape_cast %147 : vector<1x1x8x130xbf16> to vector<8x130xbf16>
    %149 = vector.extract_strided_slice %148 {offsets = [0, 0], sizes = [8, 128], strides = [1, 1]} : vector<8x130xbf16> to vector<8x128xbf16>
    %c24_130 = arith.constant 24 : index
    %c512_131 = arith.constant 512 : index
    %150 = vector.load %arg6[%c24_130, %c512_131] : memref<72x1024xbf16, #tpu.memory_space<vmem>>, vector<8x128xbf16>
    tpu.vector_store %arg6[%c24_130, %c512_131], %149 {strides = array<i32>} : memref<72x1024xbf16, #tpu.memory_space<vmem>>, vector<8x128xbf16>,
    %151 = vector.extract_strided_slice %148 {offsets = [0, 1], sizes = [8, 128], strides = [1, 1]} : vector<8x130xbf16> to vector<8x128xbf16>
    %c32_132 = arith.constant 32 : index
    %c512_133 = arith.constant 512 : index
    %152 = vector.load %arg6[%c32_132, %c512_133] : memref<72x1024xbf16, #tpu.memory_space<vmem>>, vector<8x128xbf16>
    tpu.vector_store %arg6[%c32_132, %c512_133], %151 {strides = array<i32>} : memref<72x1024xbf16, #tpu.memory_space<vmem>>, vector<8x128xbf16>,
    %153 = vector.extract_strided_slice %148 {offsets = [0, 2], sizes = [8, 128], strides = [1, 1]} : vector<8x130xbf16> to vector<8x128xbf16>
    %c40_134 = arith.constant 40 : index
    %c512_135 = arith.constant 512 : index
    %154 = vector.load %arg6[%c40_134, %c512_135] : memref<72x1024xbf16, #tpu.memory_space<vmem>>, vector<8x128xbf16>
    tpu.vector_store %arg6[%c40_134, %c512_135], %153 {strides = array<i32>} : memref<72x1024xbf16, #tpu.memory_space<vmem>>, vector<8x128xbf16>,
    %c4_i32_136 = arith.constant 4 : i32
    %155 = arith.addi %0, %c4_i32_136 : i32
    %c2_i32_137 = arith.constant 2 : i32
    %156 = arith.addi %155, %c2_i32_137 : i32
    %c0_138 = arith.constant 0 : index
    %157 = arith.index_cast %156 : i32 to index
    %c0_139 = arith.constant 0 : index
    %c0_140 = arith.constant 0 : index
    %158 = vector.load %arg2[%c0_138, %157, %c0_139, %c0_140] : memref<1x18x8x130xbf16, #tpu.memory_space<vmem>>, vector<1x1x8x130xbf16>
    %159 = vector.shape_cast %158 : vector<1x1x8x130xbf16> to vector<8x130xbf16>
    %160 = vector.extract_strided_slice %159 {offsets = [0, 0], sizes = [8, 128], strides = [1, 1]} : vector<8x130xbf16> to vector<8x128xbf16>
    %c48_141 = arith.constant 48 : index
    %c512_142 = arith.constant 512 : index
    %161 = vector.load %arg6[%c48_141, %c512_142] : memref<72x1024xbf16, #tpu.memory_space<vmem>>, vector<8x128xbf16>
    tpu.vector_store %arg6[%c48_141, %c512_142], %160 {strides = array<i32>} : memref<72x1024xbf16, #tpu.memory_space<vmem>>, vector<8x128xbf16>,
    %162 = vector.extract_strided_slice %159 {offsets = [0, 1], sizes = [8, 128], strides = [1, 1]} : vector<8x130xbf16> to vector<8x128xbf16>
    %c56_143 = arith.constant 56 : index
    %c512_144 = arith.constant 512 : index
    %163 = vector.load %arg6[%c56_143, %c512_144] : memref<72x1024xbf16, #tpu.memory_space<vmem>>, vector<8x128xbf16>
    tpu.vector_store %arg6[%c56_143, %c512_144], %162 {strides = array<i32>} : memref<72x1024xbf16, #tpu.memory_space<vmem>>, vector<8x128xbf16>,
    %164 = vector.extract_strided_slice %159 {offsets = [0, 2], sizes = [8, 128], strides = [1, 1]} : vector<8x130xbf16> to vector<8x128xbf16>
    %c64_145 = arith.constant 64 : index
    %c512_146 = arith.constant 512 : index
    %165 = vector.load %arg6[%c64_145, %c512_146] : memref<72x1024xbf16, #tpu.memory_space<vmem>>, vector<8x128xbf16>
    tpu.vector_store %arg6[%c64_145, %c512_146], %164 {strides = array<i32>} : memref<72x1024xbf16, #tpu.memory_space<vmem>>, vector<8x128xbf16>,
    %c5_i32 = arith.constant 5 : i32
    %166 = arith.addi %0, %c5_i32 : i32
    %c0_i32_147 = arith.constant 0 : i32
    %167 = arith.addi %166, %c0_i32_147 : i32
    %c0_148 = arith.constant 0 : index
    %168 = arith.index_cast %167 : i32 to index
    %c0_149 = arith.constant 0 : index
    %c0_150 = arith.constant 0 : index
    %169 = vector.load %arg2[%c0_148, %168, %c0_149, %c0_150] : memref<1x18x8x130xbf16, #tpu.memory_space<vmem>>, vector<1x1x8x130xbf16>
    %170 = vector.shape_cast %169 : vector<1x1x8x130xbf16> to vector<8x130xbf16>
    %171 = vector.extract_strided_slice %170 {offsets = [0, 0], sizes = [8, 128], strides = [1, 1]} : vector<8x130xbf16> to vector<8x128xbf16>
    %c0_151 = arith.constant 0 : index
    %c640 = arith.constant 640 : index
    %172 = vector.load %arg6[%c0_151, %c640] : memref<72x1024xbf16, #tpu.memory_space<vmem>>, vector<8x128xbf16>
    tpu.vector_store %arg6[%c0_151, %c640], %171 {strides = array<i32>} : memref<72x1024xbf16, #tpu.memory_space<vmem>>, vector<8x128xbf16>,
    %173 = vector.extract_strided_slice %170 {offsets = [0, 1], sizes = [8, 128], strides = [1, 1]} : vector<8x130xbf16> to vector<8x128xbf16>
    %c8_152 = arith.constant 8 : index
    %c640_153 = arith.constant 640 : index
    %174 = vector.load %arg6[%c8_152, %c640_153] : memref<72x1024xbf16, #tpu.memory_space<vmem>>, vector<8x128xbf16>
    tpu.vector_store %arg6[%c8_152, %c640_153], %173 {strides = array<i32>} : memref<72x1024xbf16, #tpu.memory_space<vmem>>, vector<8x128xbf16>,
    %175 = vector.extract_strided_slice %170 {offsets = [0, 2], sizes = [8, 128], strides = [1, 1]} : vector<8x130xbf16> to vector<8x128xbf16>
    %c16_154 = arith.constant 16 : index
    %c640_155 = arith.constant 640 : index
    %176 = vector.load %arg6[%c16_154, %c640_155] : memref<72x1024xbf16, #tpu.memory_space<vmem>>, vector<8x128xbf16>
    tpu.vector_store %arg6[%c16_154, %c640_155], %175 {strides = array<i32>} : memref<72x1024xbf16, #tpu.memory_space<vmem>>, vector<8x128xbf16>,
    %c5_i32_156 = arith.constant 5 : i32
    %177 = arith.addi %0, %c5_i32_156 : i32
    %c1_i32_157 = arith.constant 1 : i32
    %178 = arith.addi %177, %c1_i32_157 : i32
    %c0_158 = arith.constant 0 : index
    %179 = arith.index_cast %178 : i32 to index
    %c0_159 = arith.constant 0 : index
    %c0_160 = arith.constant 0 : index
    %180 = vector.load %arg2[%c0_158, %179, %c0_159, %c0_160] : memref<1x18x8x130xbf16, #tpu.memory_space<vmem>>, vector<1x1x8x130xbf16>
    %181 = vector.shape_cast %180 : vector<1x1x8x130xbf16> to vector<8x130xbf16>
    %182 = vector.extract_strided_slice %181 {offsets = [0, 0], sizes = [8, 128], strides = [1, 1]} : vector<8x130xbf16> to vector<8x128xbf16>
    %c24_161 = arith.constant 24 : index
    %c640_162 = arith.constant 640 : index
    %183 = vector.load %arg6[%c24_161, %c640_162] : memref<72x1024xbf16, #tpu.memory_space<vmem>>, vector<8x128xbf16>
    tpu.vector_store %arg6[%c24_161, %c640_162], %182 {strides = array<i32>} : memref<72x1024xbf16, #tpu.memory_space<vmem>>, vector<8x128xbf16>,
    %184 = vector.extract_strided_slice %181 {offsets = [0, 1], sizes = [8, 128], strides = [1, 1]} : vector<8x130xbf16> to vector<8x128xbf16>
    %c32_163 = arith.constant 32 : index
    %c640_164 = arith.constant 640 : index
    %185 = vector.load %arg6[%c32_163, %c640_164] : memref<72x1024xbf16, #tpu.memory_space<vmem>>, vector<8x128xbf16>
    tpu.vector_store %arg6[%c32_163, %c640_164], %184 {strides = array<i32>} : memref<72x1024xbf16, #tpu.memory_space<vmem>>, vector<8x128xbf16>,
    %186 = vector.extract_strided_slice %181 {offsets = [0, 2], sizes = [8, 128], strides = [1, 1]} : vector<8x130xbf16> to vector<8x128xbf16>
    %c40_165 = arith.constant 40 : index
    %c640_166 = arith.constant 640 : index
    %187 = vector.load %arg6[%c40_165, %c640_166] : memref<72x1024xbf16, #tpu.memory_space<vmem>>, vector<8x128xbf16>
    tpu.vector_store %arg6[%c40_165, %c640_166], %186 {strides = array<i32>} : memref<72x1024xbf16, #tpu.memory_space<vmem>>, vector<8x128xbf16>,
    %c5_i32_167 = arith.constant 5 : i32
    %188 = arith.addi %0, %c5_i32_167 : i32
    %c2_i32_168 = arith.constant 2 : i32
    %189 = arith.addi %188, %c2_i32_168 : i32
    %c0_169 = arith.constant 0 : index
    %190 = arith.index_cast %189 : i32 to index
    %c0_170 = arith.constant 0 : index
    %c0_171 = arith.constant 0 : index
    %191 = vector.load %arg2[%c0_169, %190, %c0_170, %c0_171] : memref<1x18x8x130xbf16, #tpu.memory_space<vmem>>, vector<1x1x8x130xbf16>
    %192 = vector.shape_cast %191 : vector<1x1x8x130xbf16> to vector<8x130xbf16>
    %193 = vector.extract_strided_slice %192 {offsets = [0, 0], sizes = [8, 128], strides = [1, 1]} : vector<8x130xbf16> to vector<8x128xbf16>
    %c48_172 = arith.constant 48 : index
    %c640_173 = arith.constant 640 : index
    %194 = vector.load %arg6[%c48_172, %c640_173] : memref<72x1024xbf16, #tpu.memory_space<vmem>>, vector<8x128xbf16>
    tpu.vector_store %arg6[%c48_172, %c640_173], %193 {strides = array<i32>} : memref<72x1024xbf16, #tpu.memory_space<vmem>>, vector<8x128xbf16>,
    %195 = vector.extract_strided_slice %192 {offsets = [0, 1], sizes = [8, 128], strides = [1, 1]} : vector<8x130xbf16> to vector<8x128xbf16>
    %c56_174 = arith.constant 56 : index
    %c640_175 = arith.constant 640 : index
    %196 = vector.load %arg6[%c56_174, %c640_175] : memref<72x1024xbf16, #tpu.memory_space<vmem>>, vector<8x128xbf16>
    tpu.vector_store %arg6[%c56_174, %c640_175], %195 {strides = array<i32>} : memref<72x1024xbf16, #tpu.memory_space<vmem>>, vector<8x128xbf16>,
    %197 = vector.extract_strided_slice %192 {offsets = [0, 2], sizes = [8, 128], strides = [1, 1]} : vector<8x130xbf16> to vector<8x128xbf16>
    %c64_176 = arith.constant 64 : index
    %c640_177 = arith.constant 640 : index
    %198 = vector.load %arg6[%c64_176, %c640_177] : memref<72x1024xbf16, #tpu.memory_space<vmem>>, vector<8x128xbf16>
    tpu.vector_store %arg6[%c64_176, %c640_177], %197 {strides = array<i32>} : memref<72x1024xbf16, #tpu.memory_space<vmem>>, vector<8x128xbf16>,
    %c6_i32 = arith.constant 6 : i32
    %199 = arith.addi %0, %c6_i32 : i32
    %c0_i32_178 = arith.constant 0 : i32
    %200 = arith.addi %199, %c0_i32_178 : i32
    %c0_179 = arith.constant 0 : index
    %201 = arith.index_cast %200 : i32 to index
    %c0_180 = arith.constant 0 : index
    %c0_181 = arith.constant 0 : index
    %202 = vector.load %arg2[%c0_179, %201, %c0_180, %c0_181] : memref<1x18x8x130xbf16, #tpu.memory_space<vmem>>, vector<1x1x8x130xbf16>
    %203 = vector.shape_cast %202 : vector<1x1x8x130xbf16> to vector<8x130xbf16>
    %204 = vector.extract_strided_slice %203 {offsets = [0, 0], sizes = [8, 128], strides = [1, 1]} : vector<8x130xbf16> to vector<8x128xbf16>
    %c0_182 = arith.constant 0 : index
    %c768 = arith.constant 768 : index
    %205 = vector.load %arg6[%c0_182, %c768] : memref<72x1024xbf16, #tpu.memory_space<vmem>>, vector<8x128xbf16>
    tpu.vector_store %arg6[%c0_182, %c768], %204 {strides = array<i32>} : memref<72x1024xbf16, #tpu.memory_space<vmem>>, vector<8x128xbf16>,
    %206 = vector.extract_strided_slice %203 {offsets = [0, 1], sizes = [8, 128], strides = [1, 1]} : vector<8x130xbf16> to vector<8x128xbf16>
    %c8_183 = arith.constant 8 : index
    %c768_184 = arith.constant 768 : index
    %207 = vector.load %arg6[%c8_183, %c768_184] : memref<72x1024xbf16, #tpu.memory_space<vmem>>, vector<8x128xbf16>
    tpu.vector_store %arg6[%c8_183, %c768_184], %206 {strides = array<i32>} : memref<72x1024xbf16, #tpu.memory_space<vmem>>, vector<8x128xbf16>,
    %208 = vector.extract_strided_slice %203 {offsets = [0, 2], sizes = [8, 128], strides = [1, 1]} : vector<8x130xbf16> to vector<8x128xbf16>
    %c16_185 = arith.constant 16 : index
    %c768_186 = arith.constant 768 : index
    %209 = vector.load %arg6[%c16_185, %c768_186] : memref<72x1024xbf16, #tpu.memory_space<vmem>>, vector<8x128xbf16>
    tpu.vector_store %arg6[%c16_185, %c768_186], %208 {strides = array<i32>} : memref<72x1024xbf16, #tpu.memory_space<vmem>>, vector<8x128xbf16>,
    %c6_i32_187 = arith.constant 6 : i32
    %210 = arith.addi %0, %c6_i32_187 : i32
    %c1_i32_188 = arith.constant 1 : i32
    %211 = arith.addi %210, %c1_i32_188 : i32
    %c0_189 = arith.constant 0 : index
    %212 = arith.index_cast %211 : i32 to index
    %c0_190 = arith.constant 0 : index
    %c0_191 = arith.constant 0 : index
    %213 = vector.load %arg2[%c0_189, %212, %c0_190, %c0_191] : memref<1x18x8x130xbf16, #tpu.memory_space<vmem>>, vector<1x1x8x130xbf16>
    %214 = vector.shape_cast %213 : vector<1x1x8x130xbf16> to vector<8x130xbf16>
    %215 = vector.extract_strided_slice %214 {offsets = [0, 0], sizes = [8, 128], strides = [1, 1]} : vector<8x130xbf16> to vector<8x128xbf16>
    %c24_192 = arith.constant 24 : index
    %c768_193 = arith.constant 768 : index
    %216 = vector.load %arg6[%c24_192, %c768_193] : memref<72x1024xbf16, #tpu.memory_space<vmem>>, vector<8x128xbf16>
    tpu.vector_store %arg6[%c24_192, %c768_193], %215 {strides = array<i32>} : memref<72x1024xbf16, #tpu.memory_space<vmem>>, vector<8x128xbf16>,
    %217 = vector.extract_strided_slice %214 {offsets = [0, 1], sizes = [8, 128], strides = [1, 1]} : vector<8x130xbf16> to vector<8x128xbf16>
    %c32_194 = arith.constant 32 : index
    %c768_195 = arith.constant 768 : index
    %218 = vector.load %arg6[%c32_194, %c768_195] : memref<72x1024xbf16, #tpu.memory_space<vmem>>, vector<8x128xbf16>
    tpu.vector_store %arg6[%c32_194, %c768_195], %217 {strides = array<i32>} : memref<72x1024xbf16, #tpu.memory_space<vmem>>, vector<8x128xbf16>,
    %219 = vector.extract_strided_slice %214 {offsets = [0, 2], sizes = [8, 128], strides = [1, 1]} : vector<8x130xbf16> to vector<8x128xbf16>
    %c40_196 = arith.constant 40 : index
    %c768_197 = arith.constant 768 : index
    %220 = vector.load %arg6[%c40_196, %c768_197] : memref<72x1024xbf16, #tpu.memory_space<vmem>>, vector<8x128xbf16>
    tpu.vector_store %arg6[%c40_196, %c768_197], %219 {strides = array<i32>} : memref<72x1024xbf16, #tpu.memory_space<vmem>>, vector<8x128xbf16>,
    %c6_i32_198 = arith.constant 6 : i32
    %221 = arith.addi %0, %c6_i32_198 : i32
    %c2_i32_199 = arith.constant 2 : i32
    %222 = arith.addi %221, %c2_i32_199 : i32
    %c0_200 = arith.constant 0 : index
    %223 = arith.index_cast %222 : i32 to index
    %c0_201 = arith.constant 0 : index
    %c0_202 = arith.constant 0 : index
    %224 = vector.load %arg2[%c0_200, %223, %c0_201, %c0_202] : memref<1x18x8x130xbf16, #tpu.memory_space<vmem>>, vector<1x1x8x130xbf16>
    %225 = vector.shape_cast %224 : vector<1x1x8x130xbf16> to vector<8x130xbf16>
    %226 = vector.extract_strided_slice %225 {offsets = [0, 0], sizes = [8, 128], strides = [1, 1]} : vector<8x130xbf16> to vector<8x128xbf16>
    %c48_203 = arith.constant 48 : index
    %c768_204 = arith.constant 768 : index
    %227 = vector.load %arg6[%c48_203, %c768_204] : memref<72x1024xbf16, #tpu.memory_space<vmem>>, vector<8x128xbf16>
    tpu.vector_store %arg6[%c48_203, %c768_204], %226 {strides = array<i32>} : memref<72x1024xbf16, #tpu.memory_space<vmem>>, vector<8x128xbf16>,
    %228 = vector.extract_strided_slice %225 {offsets = [0, 1], sizes = [8, 128], strides = [1, 1]} : vector<8x130xbf16> to vector<8x128xbf16>
    %c56_205 = arith.constant 56 : index
    %c768_206 = arith.constant 768 : index
    %229 = vector.load %arg6[%c56_205, %c768_206] : memref<72x1024xbf16, #tpu.memory_space<vmem>>, vector<8x128xbf16>
    tpu.vector_store %arg6[%c56_205, %c768_206], %228 {strides = array<i32>} : memref<72x1024xbf16, #tpu.memory_space<vmem>>, vector<8x128xbf16>,
    %230 = vector.extract_strided_slice %225 {offsets = [0, 2], sizes = [8, 128], strides = [1, 1]} : vector<8x130xbf16> to vector<8x128xbf16>
    %c64_207 = arith.constant 64 : index
    %c768_208 = arith.constant 768 : index
    %231 = vector.load %arg6[%c64_207, %c768_208] : memref<72x1024xbf16, #tpu.memory_space<vmem>>, vector<8x128xbf16>
    tpu.vector_store %arg6[%c64_207, %c768_208], %230 {strides = array<i32>} : memref<72x1024xbf16, #tpu.memory_space<vmem>>, vector<8x128xbf16>,
    %c7_i32 = arith.constant 7 : i32
    %232 = arith.addi %0, %c7_i32 : i32
    %c0_i32_209 = arith.constant 0 : i32
    %233 = arith.addi %232, %c0_i32_209 : i32
    %c0_210 = arith.constant 0 : index
    %234 = arith.index_cast %233 : i32 to index
    %c0_211 = arith.constant 0 : index
    %c0_212 = arith.constant 0 : index
    %235 = vector.load %arg2[%c0_210, %234, %c0_211, %c0_212] : memref<1x18x8x130xbf16, #tpu.memory_space<vmem>>, vector<1x1x8x130xbf16>
    %236 = vector.shape_cast %235 : vector<1x1x8x130xbf16> to vector<8x130xbf16>
    %237 = vector.extract_strided_slice %236 {offsets = [0, 0], sizes = [8, 128], strides = [1, 1]} : vector<8x130xbf16> to vector<8x128xbf16>
    %c0_213 = arith.constant 0 : index
    %c896 = arith.constant 896 : index
    %238 = vector.load %arg6[%c0_213, %c896] : memref<72x1024xbf16, #tpu.memory_space<vmem>>, vector<8x128xbf16>
    tpu.vector_store %arg6[%c0_213, %c896], %237 {strides = array<i32>} : memref<72x1024xbf16, #tpu.memory_space<vmem>>, vector<8x128xbf16>,
    %239 = vector.extract_strided_slice %236 {offsets = [0, 1], sizes = [8, 128], strides = [1, 1]} : vector<8x130xbf16> to vector<8x128xbf16>
    %c8_214 = arith.constant 8 : index
    %c896_215 = arith.constant 896 : index
    %240 = vector.load %arg6[%c8_214, %c896_215] : memref<72x1024xbf16, #tpu.memory_space<vmem>>, vector<8x128xbf16>
    tpu.vector_store %arg6[%c8_214, %c896_215], %239 {strides = array<i32>} : memref<72x1024xbf16, #tpu.memory_space<vmem>>, vector<8x128xbf16>,
    %241 = vector.extract_strided_slice %236 {offsets = [0, 2], sizes = [8, 128], strides = [1, 1]} : vector<8x130xbf16> to vector<8x128xbf16>
    %c16_216 = arith.constant 16 : index
    %c896_217 = arith.constant 896 : index
    %242 = vector.load %arg6[%c16_216, %c896_217] : memref<72x1024xbf16, #tpu.memory_space<vmem>>, vector<8x128xbf16>
    tpu.vector_store %arg6[%c16_216, %c896_217], %241 {strides = array<i32>} : memref<72x1024xbf16, #tpu.memory_space<vmem>>, vector<8x128xbf16>,
    %c7_i32_218 = arith.constant 7 : i32
    %243 = arith.addi %0, %c7_i32_218 : i32
    %c1_i32_219 = arith.constant 1 : i32
    %244 = arith.addi %243, %c1_i32_219 : i32
    %c0_220 = arith.constant 0 : index
    %245 = arith.index_cast %244 : i32 to index
    %c0_221 = arith.constant 0 : index
    %c0_222 = arith.constant 0 : index
    %246 = vector.load %arg2[%c0_220, %245, %c0_221, %c0_222] : memref<1x18x8x130xbf16, #tpu.memory_space<vmem>>, vector<1x1x8x130xbf16>
    %247 = vector.shape_cast %246 : vector<1x1x8x130xbf16> to vector<8x130xbf16>
    %248 = vector.extract_strided_slice %247 {offsets = [0, 0], sizes = [8, 128], strides = [1, 1]} : vector<8x130xbf16> to vector<8x128xbf16>
    %c24_223 = arith.constant 24 : index
    %c896_224 = arith.constant 896 : index
    %249 = vector.load %arg6[%c24_223, %c896_224] : memref<72x1024xbf16, #tpu.memory_space<vmem>>, vector<8x128xbf16>
    tpu.vector_store %arg6[%c24_223, %c896_224], %248 {strides = array<i32>} : memref<72x1024xbf16, #tpu.memory_space<vmem>>, vector<8x128xbf16>,
    %250 = vector.extract_strided_slice %247 {offsets = [0, 1], sizes = [8, 128], strides = [1, 1]} : vector<8x130xbf16> to vector<8x128xbf16>
    %c32_225 = arith.constant 32 : index
    %c896_226 = arith.constant 896 : index
    %251 = vector.load %arg6[%c32_225, %c896_226] : memref<72x1024xbf16, #tpu.memory_space<vmem>>, vector<8x128xbf16>
    tpu.vector_store %arg6[%c32_225, %c896_226], %250 {strides = array<i32>} : memref<72x1024xbf16, #tpu.memory_space<vmem>>, vector<8x128xbf16>,
    %252 = vector.extract_strided_slice %247 {offsets = [0, 2], sizes = [8, 128], strides = [1, 1]} : vector<8x130xbf16> to vector<8x128xbf16>
    %c40_227 = arith.constant 40 : index
    %c896_228 = arith.constant 896 : index
    %253 = vector.load %arg6[%c40_227, %c896_228] : memref<72x1024xbf16, #tpu.memory_space<vmem>>, vector<8x128xbf16>
    tpu.vector_store %arg6[%c40_227, %c896_228], %252 {strides = array<i32>} : memref<72x1024xbf16, #tpu.memory_space<vmem>>, vector<8x128xbf16>,
    %c7_i32_229 = arith.constant 7 : i32
    %254 = arith.addi %0, %c7_i32_229 : i32
    %c2_i32_230 = arith.constant 2 : i32
    %255 = arith.addi %254, %c2_i32_230 : i32
    %c0_231 = arith.constant 0 : index
    %256 = arith.index_cast %255 : i32 to index
    %c0_232 = arith.constant 0 : index
    %c0_233 = arith.constant 0 : index
    %257 = vector.load %arg2[%c0_231, %256, %c0_232, %c0_233] : memref<1x18x8x130xbf16, #tpu.memory_space<vmem>>, vector<1x1x8x130xbf16>
    %258 = vector.shape_cast %257 : vector<1x1x8x130xbf16> to vector<8x130xbf16>
    %259 = vector.extract_strided_slice %258 {offsets = [0, 0], sizes = [8, 128], strides = [1, 1]} : vector<8x130xbf16> to vector<8x128xbf16>
    %c48_234 = arith.constant 48 : index
    %c896_235 = arith.constant 896 : index
    %260 = vector.load %arg6[%c48_234, %c896_235] : memref<72x1024xbf16, #tpu.memory_space<vmem>>, vector<8x128xbf16>
    tpu.vector_store %arg6[%c48_234, %c896_235], %259 {strides = array<i32>} : memref<72x1024xbf16, #tpu.memory_space<vmem>>, vector<8x128xbf16>,
    %261 = vector.extract_strided_slice %258 {offsets = [0, 1], sizes = [8, 128], strides = [1, 1]} : vector<8x130xbf16> to vector<8x128xbf16>
    %c56_236 = arith.constant 56 : index
    %c896_237 = arith.constant 896 : index
    %262 = vector.load %arg6[%c56_236, %c896_237] : memref<72x1024xbf16, #tpu.memory_space<vmem>>, vector<8x128xbf16>
    tpu.vector_store %arg6[%c56_236, %c896_237], %261 {strides = array<i32>} : memref<72x1024xbf16, #tpu.memory_space<vmem>>, vector<8x128xbf16>,
    %263 = vector.extract_strided_slice %258 {offsets = [0, 2], sizes = [8, 128], strides = [1, 1]} : vector<8x130xbf16> to vector<8x128xbf16>
    %c64_238 = arith.constant 64 : index
    %c896_239 = arith.constant 896 : index
    %264 = vector.load %arg6[%c64_238, %c896_239] : memref<72x1024xbf16, #tpu.memory_space<vmem>>, vector<8x128xbf16>
    tpu.vector_store %arg6[%c64_238, %c896_239], %263 {strides = array<i32>} : memref<72x1024xbf16, #tpu.memory_space<vmem>>, vector<8x128xbf16>,
    %c0_240 = arith.constant 0 : index
    %c0_241 = arith.constant 0 : index
    %265 = vector.load %arg3[%c0_240, %c0_241] : memref<8x72xbf16, #tpu.memory_space<vmem>>, vector<8x72xbf16>
    %c0_242 = arith.constant 0 : index
    %c0_243 = arith.constant 0 : index
    %266 = vector.load %arg6[%c0_242, %c0_243] : memref<72x1024xbf16, #tpu.memory_space<vmem>>, vector<72x1024xbf16>
    %cst = arith.constant dense<0.000000e+00> : vector<8x1024xf32>
    %267 = tpu.matmul %265, %266, %cst {dimension_numbers = #tpu.dot_dimension_numbers<[1], [0], [0], [1], [0, 0, 1, 1], [], []>} : vector<8x72xbf16>, vector<72x1024xbf16>, vector<8x1024xf32> -> vector<8x1024xf32>
    %c0_244 = arith.constant 0 : index
    %c0_245 = arith.constant 0 : index
    %268 = vector.load %arg4[%c0_244, %c0_245] : memref<8x1xf32, #tpu.memory_space<vmem>>, vector<8x1xf32>
    %269 = vector.broadcast %268 : vector<8x1xf32> to vector<8x1024xf32>
    %270 = arith.addf %267, %269 : vector<8x1024xf32>
    %c0_246 = arith.constant 0 : index
    %c0_247 = arith.constant 0 : index
    %c0_248 = arith.constant 0 : index
    %271 = vector.load %arg5[%c0_246, %c0_247, %c0_248] : memref<1x8x1024xf32, #tpu.memory_space<vmem>>, vector<1x8x1024xf32>
    %272 = vector.shape_cast %271 : vector<1x8x1024xf32> to vector<8x1024xf32>
    %273 = vector.shape_cast %270 : vector<8x1024xf32> to vector<1x8x1024xf32>
    tpu.vector_store %arg5[%c0_246, %c0_247, %c0_248], %273 {strides = array<i32>} : memref<1x8x1024xf32, #tpu.memory_space<vmem>>, vector<1x8x1024xf32>,
    return
  }
  func.func @transform_0(%arg0: i32, %arg1: i32) -> (i32, i32, i32, i32) {
    %c0_i32 = arith.constant 0 : i32
    %c0_i32_0 = arith.constant 0 : i32
    %c0_i32_1 = arith.constant 0 : i32
    %c0_i32_2 = arith.constant 0 : i32
    return %arg0, %c0_i32, %c0_i32_0, %c0_i32_1 : i32, i32, i32, i32
  }
  func.func @transform_1(%arg0: i32, %arg1: i32) -> (i32, i32) {
    %c0_i32 = arith.constant 0 : i32
    %c0_i32_0 = arith.constant 0 : i32
    %c0_i32_1 = arith.constant 0 : i32
    return %c0_i32, %c0_i32_0 : i32, i32
  }
  func.func @transform_2(%arg0: i32, %arg1: i32) -> (i32, i32) {
    %c0_i32 = arith.constant 0 : i32
    %c0_i32_0 = arith.constant 0 : i32
    %c0_i32_1 = arith.constant 0 : i32
    return %c0_i32, %c0_i32_0 : i32, i32
  }
  func.func @transform_3(%arg0: i32, %arg1: i32) -> (i32, i32, i32) {
    %c0_i32 = arith.constant 0 : i32
    %c0_i32_0 = arith.constant 0 : i32
    return %arg0, %c0_i32, %arg1 : i32, i32, i32
  }
}

</mosaic_0001>

<llo_original>
// kernel: tpu_custom_call.1
$region0: #{tpu_custom_call.1}
  #allocation0 [shape = 'u32[]', space=smem, size = 0x4, offset = 0x4, fixed_abs, tag = 'smem constant byte address 0x4 - core index']
  #allocation1 [shape = 'u32[144,128]{1,0:T(1,128)}', space=vmem, size = 0x12000, scoped, tag = 'internal scratch']
  #allocation2 [shape = 'bf16[72,1024]{1,0:T(8,128)(2,1)}', space=vmem, size = 0x24000, scoped, tag = 'scratch operand']
  %s0 = inlined_call_operand.hbm [shape: bf16[2,18,8,130], index: 0, kind: input, shape index: {}]
  %s1 = inlined_call_operand.vmem [shape: bf16[8,72], index: 1, kind: input, shape index: {}]
  %s2 = inlined_call_operand.vmem [shape: f32[8,1], index: 2, kind: input, shape index: {}]
  %s3 = inlined_call_operand.hbm [shape: f32[2,8,2048], index: 3, kind: output, shape index: {}]
  %s4 = sld [smem:[#allocation0]]
  $region49: #{tpu_custom_call.1} parent=0
    _
  %s6 = ssub.s32 1, %s4
  %s7 = scalar_select 0, %s6, %s4
  $region1: #{tpu_custom_call.1} parent=0
    #allocation3 [shape = 'u8[147456]{0}', space=vmem, size = 0x24000, scoped, tag = 'input window, operand 0']
    #allocation4 [shape = 's32[2]{0}', space=sflag, size = 0x8, scoped, tag = 'scoped memory for tpu_custom_call.1']
    #allocation5 [shape = 's32[2]{0}', space=sflag, size = 0x8, scoped, tag = 'scoped memory for tpu_custom_call.1']
    #allocation6 [shape = 'u8[65536]{0}', space=vmem, size = 0x10000, scoped, tag = 'output window, operand 0']
    %8 = vsyncpa [#allocation4], 0
    %s9 = scalar_lea.sflag [#allocation4], 1
    %10 = vsyncpa %s9, 0
    %11 = vsyncpa [#allocation5], 0
    %s12 = scalar_lea.sflag [#allocation5], 1
    %13 = vsyncpa %s12, 0
    loop: start=0, step=1, limit=6
    $region2: #{tpu_custom_call.1} parent=1 // loop_pre_header
      _
    $region3: #{tpu_custom_call.1} parent=1 // loop_header
      %s15 = sphi 0, %s19
      %p16 = scmp.ge.s32.totalorder %s15, 6
      %s22 = sphi 0, %s34
      %s23 = sphi 0, %s30
      %s24 = sphi 0, %s22
      %s25 = sphi 0, %s23
      %s26 = sphi 0, %s24
      %s27 = sphi 0, %s25
      %s37 = sphi 0, %s39
      %s40 = sphi 0, %s37
      %s41 = sphi 0, %s40
      %s57 = sphi 0, %s41
      %s61 = sphi 0, %s61
      %s63 = sphi 0, %s61
      %s64 = sphi 0, %s63
      %s78 = sphi 0, %s64
      %s82 = sphi 0, %s82
      %s84 = sphi 0, %s82
      %s85 = sphi 0, %s84
      %s99 = sphi 0, %s85
      %s107 = sphi 0, %s109
      %s110 = sphi 0, %s107
      %s111 = sphi 0, %s110
      %s127 = sphi 0, %s111
    $region4: #{tpu_custom_call.1} parent=1 // loop_header_branch
      %18 = sbr.rel (%p16) target = $region8
    $region5: #{tpu_custom_call.1} parent=1 // loop_body
      %s20 = ssub.s32 %s15, 1
      %s21 = ssub.s32 %s15, 2
      %s28 = sadd.s32 1, %s23
      %p29 = scmp.ge.s32.totalorder %s28, 2
      %s30 = scalar_select %p29, 0, %s28
      %s31 = sadd.s32 1, %s22
      %s32 = scalar_select %p29, %s31, %s22
      %p33 = scmp.ge.s32.totalorder %s32, 2
      %s34 = scalar_select %p33, 0, %s32
      %s35 = ssub.s32 %s22, %s34
      %p36 = scmp.eq.s32.totalorder %s35, 0
      %s38 = sadd.s32 %s37, 1
      %s39 = scalar_select %p36, %s37, %s38
      %p42 = pneg %p36
      %p43 = scmp.eq.s32.totalorder %s15, 3
      %p44 = por %p42, %p43
      %p45 = scmp.ne.s32.totalorder %s37, %s40
      %p46 = scmp.eq.s32.totalorder %s15, 0
      %p47 = por %p45, %p46
      %p48 = scmp.ne.s32.totalorder %s37, %s40
      %p49 = scmp.eq.s32.totalorder %s20, 3
      %p50 = por %p48, %p49
      %p51 = scmp.ne.s32.totalorder %s40, %s41
      %p52 = scmp.eq.s32.totalorder %s20, 0
      %p53 = por %p51, %p52
      %p54 = scmp.ne.s32.totalorder %s40, %s41
      %p55 = scmp.eq.s32.totalorder %s21, 3
      %p56 = por %p54, %p55
      %p58 = scmp.ne.s32.totalorder %s41, %s57
      %p59 = scmp.eq.s32.totalorder %s21, 0
      %p60 = por %p58, %p59
      %s62 = sadd.s32 %s61, 1
      %p65 = scmp.eq.s32.totalorder %s15, 3
      %p66 = scmp.ne.s32.totalorder %s61, %s63
      %p67 = scmp.eq.s32.totalorder %s15, 0
      %p68 = por %p66, %p67
      %p69 = scmp.ne.s32.totalorder %s61, %s63
      %p70 = scmp.eq.s32.totalorder %s20, 3
      %p71 = por %p69, %p70
      %p72 = scmp.ne.s32.totalorder %s63, %s64
      %p73 = scmp.eq.s32.totalorder %s20, 0
      %p74 = por %p72, %p73
      %p75 = scmp.ne.s32.totalorder %s63, %s64
      %p76 = scmp.eq.s32.totalorder %s21, 3
      %p77 = por %p75, %p76
      %p79 = scmp.ne.s32.totalorder %s64, %s78
      %p80 = scmp.eq.s32.totalorder %s21, 0
      %p81 = por %p79, %p80
      %s83 = sadd.s32 %s82, 1
      %p86 = scmp.eq.s32.totalorder %s15, 3
      %p87 = scmp.ne.s32.totalorder %s82, %s84
      %p88 = scmp.eq.s32.totalorder %s15, 0
      %p89 = por %p87, %p88
      %p90 = scmp.ne.s32.totalorder %s82, %s84
      %p91 = scmp.eq.s32.totalorder %s20, 3
      %p92 = por %p90, %p91
      %p93 = scmp.ne.s32.totalorder %s84, %s85
      %p94 = scmp.eq.s32.totalorder %s20, 0
      %p95 = por %p93, %p94
      %p96 = scmp.ne.s32.totalorder %s84, %s85
      %p97 = scmp.eq.s32.totalorder %s21, 3
      %p98 = por %p96, %p97
      %p100 = scmp.ne.s32.totalorder %s85, %s99
      %p101 = scmp.eq.s32.totalorder %s21, 0
      %p102 = por %p100, %p101
      %s103 = ssub.s32 %s22, %s34
      %s104 = ssub.s32 %s23, %s30
      %s105 = sor.u32 %s103, %s104
      %p106 = scmp.eq.s32.totalorder %s105, 0
      %s108 = sadd.s32 %s107, 1
      %s109 = scalar_select %p106, %s107, %s108
      %p112 = pneg %p106
      %p113 = scmp.eq.s32.totalorder %s15, 3
      %p114 = por %p112, %p113
      %p115 = scmp.ne.s32.totalorder %s107, %s110
      %p116 = scmp.eq.s32.totalorder %s15, 0
      %p117 = por %p115, %p116
      %p118 = scmp.ne.s32.totalorder %s107, %s110
      %p119 = scmp.eq.s32.totalorder %s20, 3
      %p120 = por %p118, %p119
      %p121 = scmp.ne.s32.totalorder %s110, %s111
      %p122 = scmp.eq.s32.totalorder %s20, 0
      %p123 = por %p121, %p122
      %p124 = scmp.ne.s32.totalorder %s110, %s111
      %p125 = scmp.eq.s32.totalorder %s21, 3
      %p126 = por %p124, %p125
      %p128 = scmp.ne.s32.totalorder %s111, %s127
      %p129 = scmp.eq.s32.totalorder %s21, 0
      %p130 = por %p128, %p129
      %p131 = scmp.le.s32.totalorder 1, %s15
      %p132 = scmp.lt.s32.totalorder %s15, 5
      %p133 = pnand %p131, %p132
      %p134 = pneg %p133
      // Predicated region
      $region9: #{tpu_custom_call.1} parent=5 // pred_check
        _
      $region10: #{tpu_custom_call.1} parent=5 // pred_check_branch
        %136 = sbr.rel (%p133) target = $region12
      $region11: #{tpu_custom_call.1} parent=5 // pred_region
        %s137 = ssub.s32 %s15, 1
        // Predicated region
        $region13: #{tpu_custom_call.1} parent=11 // pred_check
          %p138 = pneg %p74
        $region14: #{tpu_custom_call.1} parent=11 // pred_check_branch
          %140 = sbr.rel (%p138) target = $region16
        $region15: #{tpu_custom_call.1} parent=11 // pred_region
          _
        $region16: #{tpu_custom_call.1} parent=11 // pred_fallthru
          _
        // Predicated region
        $region17: #{tpu_custom_call.1} parent=11 // pred_check
          %p141 = pneg %p95
        $region18: #{tpu_custom_call.1} parent=11 // pred_check_branch
          %143 = sbr.rel (%p141) target = $region20
        $region19: #{tpu_custom_call.1} parent=11 // pred_region
          _
        $region20: #{tpu_custom_call.1} parent=11 // pred_fallthru
          _
      $region12: #{tpu_custom_call.1} parent=5 // pred_fallthru
        _
      %p144 = scmp.lt.s32.totalorder %s15, 4
      // Predicated region
      $region21: #{tpu_custom_call.1} parent=5 // pred_check
        %p145 = pneg %p144
      $region22: #{tpu_custom_call.1} parent=5 // pred_check_branch
        %147 = sbr.rel (%p145) target = $region24
      $region23: #{tpu_custom_call.1} parent=5 // pred_region
        // Predicated region
        $region25: #{tpu_custom_call.1} parent=23 // pred_check
          %p148 = pneg %p47
        $region26: #{tpu_custom_call.1} parent=23 // pred_check_branch
          %150 = sbr.rel (%p148) target = $region28
        $region27: #{tpu_custom_call.1} parent=23 // pred_region
          %s151 = sand.u32 %s37, 1
          %s152 = scalar_lea.sflag [#allocation4], %s151
          %s153 = sand.u32 %s37, 1
          %s154 = smul.addr %s153, 144
          %s155 = scalar_lea.vmem [#allocation3], %s154
          %s157 = ssub.s32 2304, 2304
          %158 = vsyncadd %s152, %s157
          %s159 = smul.addr %s22, 36
          %s160 = smul.addr %s159, 64
          %s161 = scalar_lea.hbm %s0, %s160
          %s162 = sshll.u32 %s155, 4
          %s163 = int_to_ptr.vmem [resolvable:$true] %s162
          %168 = dma.hbm_to_vmem [thread:$0]  %s161, 2304, %s163, %s152, 128, 128, 8
        $region28: #{tpu_custom_call.1} parent=23 // pred_fallthru
          _
      $region24: #{tpu_custom_call.1} parent=5 // pred_fallthru
        _
      %p169 = scmp.le.s32.totalorder 1, %s15
      %p170 = scmp.lt.s32.totalorder %s15, 5
      %p171 = pnand %p169, %p170
      %p172 = pneg %p171
      // Predicated region
      $region29: #{tpu_custom_call.1} parent=5 // pred_check
        _
      $region30: #{tpu_custom_call.1} parent=5 // pred_check_branch
        %174 = sbr.rel (%p171) target = $region32
      $region31: #{tpu_custom_call.1} parent=5 // pred_region
        %s175 = ssub.s32 %s15, 1
        %s176 = sand.u32 %s40, 1
        %s177 = scalar_lea.sflag [#allocation4], %s176
        %s178 = sand.u32 %s40, 1
        %s179 = smul.addr %s178, 144
        %s180 = scalar_lea.vmem [#allocation3], %s179
        // Predicated region
        $region33: #{tpu_custom_call.1} parent=31 // pred_check
          %p181 = pneg %p53
        $region34: #{tpu_custom_call.1} parent=31 // pred_check_branch
          %183 = sbr.rel (%p181) target = $region36
        $region35: #{tpu_custom_call.1} parent=31 // pred_region
          %184 = dma.done %s177, 2304
        $region36: #{tpu_custom_call.1} parent=31 // pred_fallthru
          _
        %s185 = sand.u32 %s40, 1
        %s186 = scalar_lea.sflag [#allocation4], %s185
        %s187 = sand.u32 %s40, 1
        %s188 = smul.addr %s187, 144
        %s189 = scalar_lea.vmem [#allocation3], %s188
        %p190 = pneg %p53
        %p191 = pneg %p50
        %p192 = pneg %p74
        %p193 = pneg %p71
        %p194 = pneg %p95
        %p195 = pneg %p92
        %p196 = pneg %p123
        %p197 = pneg %p120
        %s198 = sand.u32 %s110, 1
        %s199 = scalar_lea.sflag [#allocation5], %s198
        %s200 = sand.u32 %s110, 1
        %s201 = smul.addr %s200, 64
        %s202 = scalar_lea.vmem [#allocation6], %s201
        %s203 = smul.u32 8, %s25
        %s205 = smul.u32 %s25, 8
        %s206 = smul.u32 %s205, 2
        %s207 = smul.addr %s206, 4
        %s208 = scalar_lea.vmem %s180, %s207 [#allocation3]
        %v209 = vld [vmem:[%s208] sm:$0xff]
        %210 = vst [vmem:[#allocation2] sm:$0xf] %v209
        %212 = vrot.lane.b32.xlu0 %v209, 127
        %v213 = vpop.permute.xlu0 %212
        %v214 = vrot.slane %v213, 4
        %vm215 = vcmask 1039360
        %v216 = vsel %vm215, %v213, %v214
        %218 = vst [vmem:[#allocation2 + $0x20] sm:$0xf] %v216
        %219 = vrot.lane.b32.xlu0 %v209, 126
        %v220 = vpop.permute.xlu0 %219
        %v221 = vrot.slane %v220, 4
        %vm222 = vcmask 1031168
        %v223 = vsel %vm222, %v220, %v221
        %225 = vst [vmem:[#allocation2 + $0x40] sm:$0xf] %v223
        %s226 = sadd.s32 %s205, 1
        %s227 = smul.u32 %s226, 2
        %s228 = smul.addr %s227, 4
        %s229 = scalar_lea.vmem %s180, %s228 [#allocation3]
        %v230 = vld [vmem:[%s229] sm:$0xff]
        %231 = vst [vmem:[#allocation2 + $0x60] sm:$0xf] %v230
        %233 = vrot.lane.b32.xlu0 %v230, 127
        %v234 = vpop.permute.xlu0 %233
        %v235 = vrot.slane %v234, 4
        %v236 = vsel %vm215, %v234, %v235
        %238 = vst [vmem:[#allocation2 + $0x80] sm:$0xf] %v236
        %239 = vrot.lane.b32.xlu0 %v230, 126
        %v240 = vpop.permute.xlu0 %239
        %v241 = vrot.slane %v240, 4
        %v242 = vsel %vm222, %v240, %v241
        %244 = vst [vmem:[#allocation2 + $0xa0] sm:$0xf] %v242
        %s245 = sadd.s32 %s205, 2
        %s246 = smul.u32 %s245, 2
        %s247 = smul.addr %s246, 4
        %s248 = scalar_lea.vmem %s180, %s247 [#allocation3]
        %v249 = vld [vmem:[%s248] sm:$0xff]
        %250 = vst [vmem:[#allocation2 + $0xc0] sm:$0xf] %v249
        %252 = vrot.lane.b32.xlu0 %v249, 127
        %v253 = vpop.permute.xlu0 %252
        %v254 = vrot.slane %v253, 4
        %v255 = vsel %vm215, %v253, %v254
        %257 = vst [vmem:[#allocation2 + $0xe0] sm:$0xf] %v255
        %258 = vrot.lane.b32.xlu0 %v249, 126
        %v259 = vpop.permute.xlu0 %258
        %v260 = vrot.slane %v259, 4
        %v261 = vsel %vm222, %v259, %v260
        %263 = vst [vmem:[#allocation2 + $0x100] sm:$0xf] %v261
        %v264 = vld [vmem:[%s229] sm:$0xff]
        %265 = vst [vmem:[#allocation2 + $0x4] sm:$0xf] %v264
        %267 = vrot.lane.b32.xlu0 %v264, 127
        %v268 = vpop.permute.xlu0 %267
        %v269 = vrot.slane %v268, 4
        %v270 = vsel %vm215, %v268, %v269
        %272 = vst [vmem:[#allocation2 + $0x24] sm:$0xf] %v270
        %273 = vrot.lane.b32.xlu0 %v264, 126
        %v274 = vpop.permute.xlu0 %273
        %v275 = vrot.slane %v274, 4
        %v276 = vsel %vm222, %v274, %v275
        %278 = vst [vmem:[#allocation2 + $0x44] sm:$0xf] %v276
        %v279 = vld [vmem:[%s248] sm:$0xff]
        %280 = vst [vmem:[#allocation2 + $0x64] sm:$0xf] %v279
        %282 = vrot.lane.b32.xlu0 %v279, 127
        %v283 = vpop.permute.xlu0 %282
        %v284 = vrot.slane %v283, 4
        %v285 = vsel %vm215, %v283, %v284
        %287 = vst [vmem:[#allocation2 + $0x84] sm:$0xf] %v285
        %288 = vrot.lane.b32.xlu0 %v279, 126
        %v289 = vpop.permute.xlu0 %288
        %v290 = vrot.slane %v289, 4
        %v291 = vsel %vm222, %v289, %v290
        %293 = vst [vmem:[#allocation2 + $0xa4] sm:$0xf] %v291
        %s294 = sadd.s32 %s205, 3
        %s295 = smul.u32 %s294, 2
        %s296 = smul.addr %s295, 4
        %s297 = scalar_lea.vmem %s180, %s296 [#allocation3]
        %v298 = vld [vmem:[%s297] sm:$0xff]
        %299 = vst [vmem:[#allocation2 + $0xc4] sm:$0xf] %v298
        %301 = vrot.lane.b32.xlu0 %v298, 127
        %v302 = vpop.permute.xlu0 %301
        %v303 = vrot.slane %v302, 4
        %v304 = vsel %vm215, %v302, %v303
        %306 = vst [vmem:[#allocation2 + $0xe4] sm:$0xf] %v304
        %307 = vrot.lane.b32.xlu0 %v298, 126
        %v308 = vpop.permute.xlu0 %307
        %v309 = vrot.slane %v308, 4
        %v310 = vsel %vm222, %v308, %v309
        %312 = vst [vmem:[#allocation2 + $0x104] sm:$0xf] %v310
        %v313 = vld [vmem:[%s248] sm:$0xff]
        %314 = vst [vmem:[#allocation2 + $0x8] sm:$0xf] %v313
        %316 = vrot.lane.b32.xlu0 %v313, 127
        %v317 = vpop.permute.xlu0 %316
        %v318 = vrot.slane %v317, 4
        %v319 = vsel %vm215, %v317, %v318
        %321 = vst [vmem:[#allocation2 + $0x28] sm:$0xf] %v319
        %322 = vrot.lane.b32.xlu0 %v313, 126
        %v323 = vpop.permute.xlu0 %322
        %v324 = vrot.slane %v323, 4
        %v325 = vsel %vm222, %v323, %v324
        %327 = vst [vmem:[#allocation2 + $0x48] sm:$0xf] %v325
        %v328 = vld [vmem:[%s297] sm:$0xff]
        %329 = vst [vmem:[#allocation2 + $0x68] sm:$0xf] %v328
        %331 = vrot.lane.b32.xlu0 %v328, 127
        %v332 = vpop.permute.xlu0 %331
        %v333 = vrot.slane %v332, 4
        %v334 = vsel %vm215, %v332, %v333
        %336 = vst [vmem:[#allocation2 + $0x88] sm:$0xf] %v334
        %337 = vrot.lane.b32.xlu0 %v328, 126
        %v338 = vpop.permute.xlu0 %337
        %v339 = vrot.slane %v338, 4
        %v340 = vsel %vm222, %v338, %v339
        %342 = vst [vmem:[#allocation2 + $0xa8] sm:$0xf] %v340
        %s343 = sadd.s32 %s205, 4
        %s344 = smul.u32 %s343, 2
        %s345 = smul.addr %s344, 4
        %s346 = scalar_lea.vmem %s180, %s345 [#allocation3]
        %v347 = vld [vmem:[%s346] sm:$0xff]
        %348 = vst [vmem:[#allocation2 + $0xc8] sm:$0xf] %v347
        %350 = vrot.lane.b32.xlu0 %v347, 127
        %v351 = vpop.permute.xlu0 %350
        %v352 = vrot.slane %v351, 4
        %v353 = vsel %vm215, %v351, %v352
        %355 = vst [vmem:[#allocation2 + $0xe8] sm:$0xf] %v353
        %356 = vrot.lane.b32.xlu0 %v347, 126
        %v357 = vpop.permute.xlu0 %356
        %v358 = vrot.slane %v357, 4
        %v359 = vsel %vm222, %v357, %v358
        %361 = vst [vmem:[#allocation2 + $0x108] sm:$0xf] %v359
        %v362 = vld [vmem:[%s297] sm:$0xff]
        %363 = vst [vmem:[#allocation2 + $0xc] sm:$0xf] %v362
        %365 = vrot.lane.b32.xlu0 %v362, 127
        %v366 = vpop.permute.xlu0 %365
        %v367 = vrot.slane %v366, 4
        %v368 = vsel %vm215, %v366, %v367
        %370 = vst [vmem:[#allocation2 + $0x2c] sm:$0xf] %v368
        %371 = vrot.lane.b32.xlu0 %v362, 126
        %v372 = vpop.permute.xlu0 %371
        %v373 = vrot.slane %v372, 4
        %v374 = vsel %vm222, %v372, %v373
        %376 = vst [vmem:[#allocation2 + $0x4c] sm:$0xf] %v374
        %v377 = vld [vmem:[%s346] sm:$0xff]
        %378 = vst [vmem:[#allocation2 + $0x6c] sm:$0xf] %v377
        %380 = vrot.lane.b32.xlu0 %v377, 127
        %v381 = vpop.permute.xlu0 %380
        %v382 = vrot.slane %v381, 4
        %v383 = vsel %vm215, %v381, %v382
        %385 = vst [vmem:[#allocation2 + $0x8c] sm:$0xf] %v383
        %386 = vrot.lane.b32.xlu0 %v377, 126
        %v387 = vpop.permute.xlu0 %386
        %v388 = vrot.slane %v387, 4
        %v389 = vsel %vm222, %v387, %v388
        %391 = vst [vmem:[#allocation2 + $0xac] sm:$0xf] %v389
        %s392 = sadd.s32 %s205, 5
        %s393 = smul.u32 %s392, 2
        %s394 = smul.addr %s393, 4
        %s395 = scalar_lea.vmem %s180, %s394 [#allocation3]
        %v396 = vld [vmem:[%s395] sm:$0xff]
        %397 = vst [vmem:[#allocation2 + $0xcc] sm:$0xf] %v396
        %399 = vrot.lane.b32.xlu0 %v396, 127
        %v400 = vpop.permute.xlu0 %399
        %v401 = vrot.slane %v400, 4
        %v402 = vsel %vm215, %v400, %v401
        %404 = vst [vmem:[#allocation2 + $0xec] sm:$0xf] %v402
        %405 = vrot.lane.b32.xlu0 %v396, 126
        %v406 = vpop.permute.xlu0 %405
        %v407 = vrot.slane %v406, 4
        %v408 = vsel %vm222, %v406, %v407
        %410 = vst [vmem:[#allocation2 + $0x10c] sm:$0xf] %v408
        %v411 = vld [vmem:[%s346] sm:$0xff]
        %412 = vst [vmem:[#allocation2 + $0x10] sm:$0xf] %v411
        %414 = vrot.lane.b32.xlu0 %v411, 127
        %v415 = vpop.permute.xlu0 %414
        %v416 = vrot.slane %v415, 4
        %v417 = vsel %vm215, %v415, %v416
        %419 = vst [vmem:[#allocation2 + $0x30] sm:$0xf] %v417
        %420 = vrot.lane.b32.xlu0 %v411, 126
        %v421 = vpop.permute.xlu0 %420
        %v422 = vrot.slane %v421, 4
        %v423 = vsel %vm222, %v421, %v422
        %425 = vst [vmem:[#allocation2 + $0x50] sm:$0xf] %v423
        %v426 = vld [vmem:[%s395] sm:$0xff]
        %427 = vst [vmem:[#allocation2 + $0x70] sm:$0xf] %v426
        %429 = vrot.lane.b32.xlu0 %v426, 127
        %v430 = vpop.permute.xlu0 %429
        %v431 = vrot.slane %v430, 4
        %v432 = vsel %vm215, %v430, %v431
        %434 = vst [vmem:[#allocation2 + $0x90] sm:$0xf] %v432
        %435 = vrot.lane.b32.xlu0 %v426, 126
        %v436 = vpop.permute.xlu0 %435
        %v437 = vrot.slane %v436, 4
        %v438 = vsel %vm222, %v436, %v437
        %440 = vst [vmem:[#allocation2 + $0xb0] sm:$0xf] %v438
        %s441 = sadd.s32 %s205, 6
        %s442 = smul.u32 %s441, 2
        %s443 = smul.addr %s442, 4
        %s444 = scalar_lea.vmem %s180, %s443 [#allocation3]
        %v445 = vld [vmem:[%s444] sm:$0xff]
        %446 = vst [vmem:[#allocation2 + $0xd0] sm:$0xf] %v445
        %448 = vrot.lane.b32.xlu0 %v445, 127
        %v449 = vpop.permute.xlu0 %448
        %v450 = vrot.slane %v449, 4
        %v451 = vsel %vm215, %v449, %v450
        %453 = vst [vmem:[#allocation2 + $0xf0] sm:$0xf] %v451
        %454 = vrot.lane.b32.xlu0 %v445, 126
        %v455 = vpop.permute.xlu0 %454
        %v456 = vrot.slane %v455, 4
        %v457 = vsel %vm222, %v455, %v456
        %459 = vst [vmem:[#allocation2 + $0x110] sm:$0xf] %v457
        %v460 = vld [vmem:[%s395] sm:$0xff]
        %461 = vst [vmem:[#allocation2 + $0x14] sm:$0xf] %v460
        %463 = vrot.lane.b32.xlu0 %v460, 127
        %v464 = vpop.permute.xlu0 %463
        %v465 = vrot.slane %v464, 4
        %v466 = vsel %vm215, %v464, %v465
        %468 = vst [vmem:[#allocation2 + $0x34] sm:$0xf] %v466
        %469 = vrot.lane.b32.xlu0 %v460, 126
        %v470 = vpop.permute.xlu0 %469
        %v471 = vrot.slane %v470, 4
        %v472 = vsel %vm222, %v470, %v471
        %474 = vst [vmem:[#allocation2 + $0x54] sm:$0xf] %v472
        %v475 = vld [vmem:[%s444] sm:$0xff]
        %476 = vst [vmem:[#allocation2 + $0x74] sm:$0xf] %v475
        %478 = vrot.lane.b32.xlu0 %v475, 127
        %v479 = vpop.permute.xlu0 %478
        %v480 = vrot.slane %v479, 4
        %v481 = vsel %vm215, %v479, %v480
        %483 = vst [vmem:[#allocation2 + $0x94] sm:$0xf] %v481
        %484 = vrot.lane.b32.xlu0 %v475, 126
        %v485 = vpop.permute.xlu0 %484
        %v486 = vrot.slane %v485, 4
        %v487 = vsel %vm222, %v485, %v486
        %489 = vst [vmem:[#allocation2 + $0xb4] sm:$0xf] %v487
        %s490 = sadd.s32 %s205, 7
        %s491 = smul.u32 %s490, 2
        %s492 = smul.addr %s491, 4
        %s493 = scalar_lea.vmem %s180, %s492 [#allocation3]
        %v494 = vld [vmem:[%s493] sm:$0xff]
        %495 = vst [vmem:[#allocation2 + $0xd4] sm:$0xf] %v494
        %497 = vrot.lane.b32.xlu0 %v494, 127
        %v498 = vpop.permute.xlu0 %497
        %v499 = vrot.slane %v498, 4
        %v500 = vsel %vm215, %v498, %v499
        %502 = vst [vmem:[#allocation2 + $0xf4] sm:$0xf] %v500
        %503 = vrot.lane.b32.xlu0 %v494, 126
        %v504 = vpop.permute.xlu0 %503
        %v505 = vrot.slane %v504, 4
        %v506 = vsel %vm222, %v504, %v505
        %508 = vst [vmem:[#allocation2 + $0x114] sm:$0xf] %v506
        %v509 = vld [vmem:[%s444] sm:$0xff]
        %510 = vst [vmem:[#allocation2 + $0x18] sm:$0xf] %v509
        %512 = vrot.lane.b32.xlu0 %v509, 127
        %v513 = vpop.permute.xlu0 %512
        %v514 = vrot.slane %v513, 4
        %v515 = vsel %vm215, %v513, %v514
        %517 = vst [vmem:[#allocation2 + $0x38] sm:$0xf] %v515
        %518 = vrot.lane.b32.xlu0 %v509, 126
        %v519 = vpop.permute.xlu0 %518
        %v520 = vrot.slane %v519, 4
        %v521 = vsel %vm222, %v519, %v520
        %523 = vst [vmem:[#allocation2 + $0x58] sm:$0xf] %v521
        %v524 = vld [vmem:[%s493] sm:$0xff]
        %525 = vst [vmem:[#allocation2 + $0x78] sm:$0xf] %v524
        %527 = vrot.lane.b32.xlu0 %v524, 127
        %v528 = vpop.permute.xlu0 %527
        %v529 = vrot.slane %v528, 4
        %v530 = vsel %vm215, %v528, %v529
        %532 = vst [vmem:[#allocation2 + $0x98] sm:$0xf] %v530
        %533 = vrot.lane.b32.xlu0 %v524, 126
        %v534 = vpop.permute.xlu0 %533
        %v535 = vrot.slane %v534, 4
        %v536 = vsel %vm222, %v534, %v535
        %538 = vst [vmem:[#allocation2 + $0xb8] sm:$0xf] %v536
        %s539 = sadd.s32 %s205, 8
        %s540 = smul.u32 %s539, 2
        %s541 = smul.addr %s540, 4
        %s542 = scalar_lea.vmem %s180, %s541 [#allocation3]
        %v543 = vld [vmem:[%s542] sm:$0xff]
        %544 = vst [vmem:[#allocation2 + $0xd8] sm:$0xf] %v543
        %546 = vrot.lane.b32.xlu0 %v543, 127
        %v547 = vpop.permute.xlu0 %546
        %v548 = vrot.slane %v547, 4
        %v549 = vsel %vm215, %v547, %v548
        %551 = vst [vmem:[#allocation2 + $0xf8] sm:$0xf] %v549
        %552 = vrot.lane.b32.xlu0 %v543, 126
        %v553 = vpop.permute.xlu0 %552
        %v554 = vrot.slane %v553, 4
        %v555 = vsel %vm222, %v553, %v554
        %557 = vst [vmem:[#allocation2 + $0x118] sm:$0xf] %v555
        %v558 = vld [vmem:[%s493] sm:$0xff]
        %559 = vst [vmem:[#allocation2 + $0x1c] sm:$0xf] %v558
        %561 = vrot.lane.b32.xlu0 %v558, 127
        %v562 = vpop.permute.xlu0 %561
        %v563 = vrot.slane %v562, 4
        %v564 = vsel %vm215, %v562, %v563
        %566 = vst [vmem:[#allocation2 + $0x3c] sm:$0xf] %v564
        %567 = vrot.lane.b32.xlu0 %v558, 126
        %v568 = vpop.permute.xlu0 %567
        %v569 = vrot.slane %v568, 4
        %v570 = vsel %vm222, %v568, %v569
        %572 = vst [vmem:[#allocation2 + $0x5c] sm:$0xf] %v570
        %v573 = vld [vmem:[%s542] sm:$0xff]
        %574 = vst [vmem:[#allocation2 + $0x7c] sm:$0xf] %v573
        %576 = vrot.lane.b32.xlu0 %v573, 127
        %v577 = vpop.permute.xlu0 %576
        %v578 = vrot.slane %v577, 4
        %v579 = vsel %vm215, %v577, %v578
        %581 = vst [vmem:[#allocation2 + $0x9c] sm:$0xf] %v579
        %582 = vrot.lane.b32.xlu0 %v573, 126
        %v583 = vpop.permute.xlu0 %582
        %v584 = vrot.slane %v583, 4
        %v585 = vsel %vm222, %v583, %v584
        %587 = vst [vmem:[#allocation2 + $0xbc] sm:$0xf] %v585
        %s588 = sadd.s32 %s205, 9
        %s589 = smul.u32 %s588, 2
        %s590 = smul.addr %s589, 4
        %s591 = scalar_lea.vmem %s180, %s590 [#allocation3]
        %v592 = vld [vmem:[%s591] sm:$0xff]
        %593 = vst [vmem:[#allocation2 + $0xdc] sm:$0xf] %v592
        %595 = vrot.lane.b32.xlu0 %v592, 127
        %v596 = vpop.permute.xlu0 %595
        %v597 = vrot.slane %v596, 4
        %v598 = vsel %vm215, %v596, %v597
        %600 = vst [vmem:[#allocation2 + $0xfc] sm:$0xf] %v598
        %601 = vrot.lane.b32.xlu0 %v592, 126
        %v602 = vpop.permute.xlu0 %601
        %v603 = vrot.slane %v602, 4
        %v604 = vsel %vm222, %v602, %v603
        %606 = vst [vmem:[#allocation2 + $0x11c] sm:$0xf] %v604
        %v607 = vld [vmem:[%s1] sm:$0xf]
        %v608 = vld [vmem:[#allocation2] sm:$0xff]
        %v609 = vld [vmem:[#allocation2 + $0x8] sm:$0xff]
        %v610 = vld [vmem:[#allocation2 + $0x10] sm:$0xff]
        %v611 = vld [vmem:[#allocation2 + $0x18] sm:$0xff]
        %v612 = vld [vmem:[#allocation2 + $0x20] sm:$0xff]
        %v613 = vld [vmem:[#allocation2 + $0x28] sm:$0xff]
        %v614 = vld [vmem:[#allocation2 + $0x30] sm:$0xff]
        %v615 = vld [vmem:[#allocation2 + $0x38] sm:$0xff]
        %v616 = vld [vmem:[#allocation2 + $0x40] sm:$0xff]
        %v617 = vld [vmem:[#allocation2 + $0x48] sm:$0xff]
        %v618 = vld [vmem:[#allocation2 + $0x50] sm:$0xff]
        %v619 = vld [vmem:[#allocation2 + $0x58] sm:$0xff]
        %v620 = vld [vmem:[#allocation2 + $0x60] sm:$0xff]
        %v621 = vld [vmem:[#allocation2 + $0x68] sm:$0xff]
        %v622 = vld [vmem:[#allocation2 + $0x70] sm:$0xff]
        %v623 = vld [vmem:[#allocation2 + $0x78] sm:$0xff]
        %v624 = vld [vmem:[#allocation2 + $0x80] sm:$0xff]
        %v625 = vld [vmem:[#allocation2 + $0x88] sm:$0xff]
        %v626 = vld [vmem:[#allocation2 + $0x90] sm:$0xff]
        %v627 = vld [vmem:[#allocation2 + $0x98] sm:$0xff]
        %v628 = vld [vmem:[#allocation2 + $0xa0] sm:$0xff]
        %v629 = vld [vmem:[#allocation2 + $0xa8] sm:$0xff]
        %v630 = vld [vmem:[#allocation2 + $0xb0] sm:$0xff]
        %v631 = vld [vmem:[#allocation2 + $0xb8] sm:$0xff]
        %v632 = vld [vmem:[#allocation2 + $0xc0] sm:$0xff]
        %v633 = vld [vmem:[#allocation2 + $0xc8] sm:$0xff]
        %v634 = vld [vmem:[#allocation2 + $0xd0] sm:$0xff]
        %v635 = vld [vmem:[#allocation2 + $0xd8] sm:$0xff]
        %v636 = vld [vmem:[#allocation2 + $0xe0] sm:$0xff]
        %v637 = vld [vmem:[#allocation2 + $0xe8] sm:$0xff]
        %v638 = vld [vmem:[#allocation2 + $0xf0] sm:$0xff]
        %v639 = vld [vmem:[#allocation2 + $0xf8] sm:$0xff]
        %v640 = vld [vmem:[#allocation2 + $0x100] sm:$0xff]
        %v641 = vld [vmem:[#allocation2 + $0x108] sm:$0xff]
        %v642 = vld [vmem:[#allocation2 + $0x110] sm:$0xff]
        %v643 = vld [vmem:[#allocation2 + $0x118] sm:$0xff]
        %v644 = vld [vmem:[%s2] sm:$0xff]
        %646 = vset.pattern.permute.xlu0 0
        %647 = vperm.xlu0 %646, %v644
        %v648 = vpop.permute.xlu0 %647
        %v686 = vunpack.c.l.b16 %v608
        %v687 = vunpack.c.h.b16 %v608
        %v688 = vunpack.c.l.b16 %v609
        %v689 = vunpack.c.h.b16 %v609
        %v690 = vunpack.c.l.b16 %v610
        %v691 = vunpack.c.h.b16 %v610
        %v692 = vunpack.c.l.b16 %v611
        %v693 = vunpack.c.h.b16 %v611
        %v694 = vunpack.c.l.b16 %v612
        %v695 = vunpack.c.h.b16 %v612
        %v696 = vunpack.c.l.b16 %v613
        %v697 = vunpack.c.h.b16 %v613
        %v698 = vunpack.c.l.b16 %v614
        %v699 = vunpack.c.h.b16 %v614
        %v700 = vunpack.c.l.b16 %v615
        %v701 = vunpack.c.h.b16 %v615
        %v702 = vunpack.c.l.b16 %v616
        %v703 = vunpack.c.h.b16 %v616
        %v704 = vunpack.c.l.b16 %v617
        %v705 = vunpack.c.h.b16 %v617
        %v706 = vunpack.c.l.b16 %v618
        %v707 = vunpack.c.h.b16 %v618
        %v708 = vunpack.c.l.b16 %v619
        %v709 = vunpack.c.h.b16 %v619
        %v710 = vunpack.c.l.b16 %v620
        %v711 = vunpack.c.h.b16 %v620
        %v712 = vunpack.c.l.b16 %v621
        %v713 = vunpack.c.h.b16 %v621
        %v714 = vunpack.c.l.b16 %v622
        %v715 = vunpack.c.h.b16 %v622
        %v716 = vunpack.c.l.b16 %v623
        %v717 = vunpack.c.h.b16 %v623
        %v718 = vunpack.c.l.b16 %v624
        %v719 = vunpack.c.h.b16 %v624
        %v720 = vunpack.c.l.b16 %v625
        %v721 = vunpack.c.h.b16 %v625
        %v722 = vunpack.c.l.b16 %v626
        %v723 = vunpack.c.h.b16 %v626
        %v724 = vunpack.c.l.b16 %v627
        %v725 = vunpack.c.h.b16 %v627
        %v726 = vunpack.c.l.b16 %v628
        %v727 = vunpack.c.h.b16 %v628
        %v728 = vunpack.c.l.b16 %v629
        %v729 = vunpack.c.h.b16 %v629
        %v730 = vunpack.c.l.b16 %v630
        %v731 = vunpack.c.h.b16 %v630
        %v732 = vunpack.c.l.b16 %v631
        %v733 = vunpack.c.h.b16 %v631
        %v734 = vunpack.c.l.b16 %v632
        %v735 = vunpack.c.h.b16 %v632
        %v736 = vunpack.c.l.b16 %v633
        %v737 = vunpack.c.h.b16 %v633
        %v738 = vunpack.c.l.b16 %v634
        %v739 = vunpack.c.h.b16 %v634
        %v740 = vunpack.c.l.b16 %v635
        %v741 = vunpack.c.h.b16 %v635
        %v742 = vunpack.c.l.b16 %v636
        %v743 = vunpack.c.h.b16 %v636
        %v744 = vunpack.c.l.b16 %v637
        %v745 = vunpack.c.h.b16 %v637
        %v746 = vunpack.c.l.b16 %v638
        %v747 = vunpack.c.h.b16 %v638
        %v748 = vunpack.c.l.b16 %v639
        %v749 = vunpack.c.h.b16 %v639
        %v750 = vunpack.c.l.b16 %v640
        %v751 = vunpack.c.h.b16 %v640
        %v752 = vunpack.c.l.b16 %v641
        %v753 = vunpack.c.h.b16 %v641
        %v754 = vunpack.c.l.b16 %v642
        %v755 = vunpack.c.h.b16 %v642
        %v756 = vunpack.c.l.b16 %v643
        %v757 = vunpack.c.h.b16 %v643
        %v758 = vpack.c.b16 %v694, %v686
        %v759 = vpack.c.b16 %v695, %v687
        %v760 = vpack.c.b16 %v696, %v688
        %v761 = vpack.c.b16 %v697, %v689
        %v762 = vpack.c.b16 %v698, %v690
        %v763 = vpack.c.b16 %v699, %v691
        %v764 = vpack.c.b16 %v700, %v692
        %v765 = vpack.c.b16 %v701, %v693
        %v766 = vpack.c.b16 %v710, %v702
        %v767 = vpack.c.b16 %v711, %v703
        %v768 = vpack.c.b16 %v712, %v704
        %v769 = vpack.c.b16 %v713, %v705
        %v770 = vpack.c.b16 %v714, %v706
        %v771 = vpack.c.b16 %v715, %v707
        %v772 = vpack.c.b16 %v716, %v708
        %v773 = vpack.c.b16 %v717, %v709
        %v774 = vpack.c.b16 %v726, %v718
        %v775 = vpack.c.b16 %v727, %v719
        %v776 = vpack.c.b16 %v728, %v720
        %v777 = vpack.c.b16 %v729, %v721
        %v778 = vpack.c.b16 %v730, %v722
        %v779 = vpack.c.b16 %v731, %v723
        %v780 = vpack.c.b16 %v732, %v724
        %v781 = vpack.c.b16 %v733, %v725
        %v782 = vpack.c.b16 %v742, %v734
        %v783 = vpack.c.b16 %v743, %v735
        %v784 = vpack.c.b16 %v744, %v736
        %v785 = vpack.c.b16 %v745, %v737
        %v786 = vpack.c.b16 %v746, %v738
        %v787 = vpack.c.b16 %v747, %v739
        %v788 = vpack.c.b16 %v748, %v740
        %v789 = vpack.c.b16 %v749, %v741
        %v790 = vpack.c.b16 %v750, %v750
        %v791 = vpack.c.b16 %v751, %v751
        %v792 = vpack.c.b16 %v752, %v752
        %v793 = vpack.c.b16 %v753, %v753
        %v794 = vpack.c.b16 %v754, %v754
        %v795 = vpack.c.b16 %v755, %v755
        %v796 = vpack.c.b16 %v756, %v756
        %v797 = vpack.c.b16 %v757, %v757
        %vm830 = vcmask 588800
        %v832 = vsel %vm830, %v607, 0
        %vm834 = vcmask 1043456
        %v836 = vsel %vm834, %v790, 0
        %v839 = vsel %vm834, %v791, 0
        %v842 = vsel %vm834, %v792, 0
        %v845 = vsel %vm834, %v793, 0
        %v848 = vsel %vm834, %v794, 0
        %v851 = vsel %vm834, %v795, 0
        %v854 = vsel %vm834, %v796, 0
        %v857 = vsel %vm834, %v797, 0
        %859 = vmatprep.subr.bf16.mxu0 %v759
        %860 = vmatpush1.bf16.msra.mxu0 %v758
        %861 = vmatprep.subr.bf16.mxu0 %v767
        %862 = vmatpush1.bf16.msra.mxu0 %v766
        %863 = vmatprep.subr.bf16.mxu0 %v775
        %864 = vmatpush1.bf16.msra.mxu0 %v774
        %865 = vmatprep.subr.bf16.mxu0 %v783
        %866 = vmatpush1.bf16.msra.mxu0 %v782
        %867 = vmatprep.subr.bf16.mxu0 %v839
        %868 = vmatpush1.bf16.msra.mxu0 %v836
        %869 = vmatprep.subr.bf16.mxu0 0
        %870 = vmatpush1.bf16.msra.mxu0 0
        %871 = vmatprep.subr.bf16.mxu0 0
        %872 = vmatpush1.bf16.msra.mxu0 0
        %873 = vmatprep.subr.bf16.mxu0 0
        %874 = vmatpush1.bf16.msra.mxu0 0
        %875 = vmatprep.subr.bf16.mxu0 0
        %876 = vmatpush1.bf16.msra.mxu0 0
        %877 = vmatprep.subr.bf16.mxu0 0
        %878 = vmatpush1.bf16.msra.mxu0 0
        %879 = vmatprep.subr.bf16.mxu0 0
        %880 = vmatpush1.bf16.msra.mxu0 0
        %881 = vmatprep.subr.bf16.mxu0 0
        %882 = vmatpush1.bf16.msra.mxu0 0
        %883 = vmatprep.subr.bf16.mxu0 0
        %884 = vmatpush1.bf16.msra.mxu0 0
        %885 = vmatprep.subr.bf16.mxu0 0
        %886 = vmatpush1.bf16.msra.mxu0 0
        %887 = vmatprep.subr.bf16.mxu0 0
        %888 = vmatpush1.bf16.msra.mxu0 0
        %889 = vmatprep.subr.bf16.mxu0 0
        %890 = vmatpush1.bf16.msra.mxu0 0
        %891 = vmatprep.mubr.bf16.mxu0 0
        %892 = vmatmul.mubr.bf16.gmra.mrb[0].mxu0 %v832
        %v893 = vpop.f32.mrb[0].mxu0
        %v894 = vadd.f32 %v648, %v893
        %v895 = vpop.f32.mrb[0].mxu0
        %v896 = vadd.f32 %v648, %v895
        %v897 = vpop.f32.mrb[0].mxu0
        %v898 = vpop.f32.mrb[0].mxu0
        %899 = vdwg.mxu0
        %900 = vmatprep.subr.bf16.mxu0 %v761
        %901 = vmatpush1.bf16.msra.mxu0 %v760
        %902 = vmatprep.subr.bf16.mxu0 %v769
        %903 = vmatpush1.bf16.msra.mxu0 %v768
        %904 = vmatprep.subr.bf16.mxu0 %v777
        %905 = vmatpush1.bf16.msra.mxu0 %v776
        %906 = vmatprep.subr.bf16.mxu0 %v785
        %907 = vmatpush1.bf16.msra.mxu0 %v784
        %908 = vmatprep.subr.bf16.mxu0 %v845
        %909 = vmatpush1.bf16.msra.mxu0 %v842
        %910 = vmatprep.subr.bf16.mxu0 0
        %911 = vmatpush1.bf16.msra.mxu0 0
        %912 = vmatprep.subr.bf16.mxu0 0
        %913 = vmatpush1.bf16.msra.mxu0 0
        %914 = vmatprep.subr.bf16.mxu0 0
        %915 = vmatpush1.bf16.msra.mxu0 0
        %916 = vmatprep.subr.bf16.mxu0 0
        %917 = vmatpush1.bf16.msra.mxu0 0
        %918 = vmatprep.subr.bf16.mxu0 0
        %919 = vmatpush1.bf16.msra.mxu0 0
        %920 = vmatprep.subr.bf16.mxu0 0
        %921 = vmatpush1.bf16.msra.mxu0 0
        %922 = vmatprep.subr.bf16.mxu0 0
        %923 = vmatpush1.bf16.msra.mxu0 0
        %924 = vmatprep.subr.bf16.mxu0 0
        %925 = vmatpush1.bf16.msra.mxu0 0
        %926 = vmatprep.subr.bf16.mxu0 0
        %927 = vmatpush1.bf16.msra.mxu0 0
        %928 = vmatprep.subr.bf16.mxu0 0
        %929 = vmatpush1.bf16.msra.mxu0 0
        %930 = vmatprep.subr.bf16.mxu0 0
        %931 = vmatpush1.bf16.msra.mxu0 0
        %932 = vmatprep.mubr.bf16.mxu0 0
        %933 = vmatmul.mubr.bf16.gmra.mrb[0].mxu0 %v832
        %v934 = vpop.f32.mrb[0].mxu0
        %v935 = vadd.f32 %v648, %v934
        %v936 = vpop.f32.mrb[0].mxu0
        %v937 = vadd.f32 %v648, %v936
        %v938 = vpop.f32.mrb[0].mxu0
        %v939 = vpop.f32.mrb[0].mxu0
        %940 = vdwg.mxu0
        %941 = vmatprep.subr.bf16.mxu0 %v763
        %942 = vmatpush1.bf16.msra.mxu0 %v762
        %943 = vmatprep.subr.bf16.mxu0 %v771
        %944 = vmatpush1.bf16.msra.mxu0 %v770
        %945 = vmatprep.subr.bf16.mxu0 %v779
        %946 = vmatpush1.bf16.msra.mxu0 %v778
        %947 = vmatprep.subr.bf16.mxu0 %v787
        %948 = vmatpush1.bf16.msra.mxu0 %v786
        %949 = vmatprep.subr.bf16.mxu0 %v851
        %950 = vmatpush1.bf16.msra.mxu0 %v848
        %951 = vmatprep.subr.bf16.mxu0 0
        %952 = vmatpush1.bf16.msra.mxu0 0
        %953 = vmatprep.subr.bf16.mxu0 0
        %954 = vmatpush1.bf16.msra.mxu0 0
        %955 = vmatprep.subr.bf16.mxu0 0
        %956 = vmatpush1.bf16.msra.mxu0 0
        %957 = vmatprep.subr.bf16.mxu0 0
        %958 = vmatpush1.bf16.msra.mxu0 0
        %959 = vmatprep.subr.bf16.mxu0 0
        %960 = vmatpush1.bf16.msra.mxu0 0
        %961 = vmatprep.subr.bf16.mxu0 0
        %962 = vmatpush1.bf16.msra.mxu0 0
        %963 = vmatprep.subr.bf16.mxu0 0
        %964 = vmatpush1.bf16.msra.mxu0 0
        %965 = vmatprep.subr.bf16.mxu0 0
        %966 = vmatpush1.bf16.msra.mxu0 0
        %967 = vmatprep.subr.bf16.mxu0 0
        %968 = vmatpush1.bf16.msra.mxu0 0
        %969 = vmatprep.subr.bf16.mxu0 0
        %970 = vmatpush1.bf16.msra.mxu0 0
        %971 = vmatprep.subr.bf16.mxu0 0
        %972 = vmatpush1.bf16.msra.mxu0 0
        %973 = vmatprep.mubr.bf16.mxu0 0
        %974 = vmatmul.mubr.bf16.gmra.mrb[0].mxu0 %v832
        %v975 = vpop.f32.mrb[0].mxu0
        %v976 = vadd.f32 %v648, %v975
        %v977 = vpop.f32.mrb[0].mxu0
        %v978 = vadd.f32 %v648, %v977
        %v979 = vpop.f32.mrb[0].mxu0
        %v980 = vpop.f32.mrb[0].mxu0
        %981 = vdwg.mxu0
        %982 = vmatprep.subr.bf16.mxu0 %v765
        %983 = vmatpush1.bf16.msra.mxu0 %v764
        %984 = vmatprep.subr.bf16.mxu0 %v773
        %985 = vmatpush1.bf16.msra.mxu0 %v772
        %986 = vmatprep.subr.bf16.mxu0 %v781
        %987 = vmatpush1.bf16.msra.mxu0 %v780
        %988 = vmatprep.subr.bf16.mxu0 %v789
        %989 = vmatpush1.bf16.msra.mxu0 %v788
        %990 = vmatprep.subr.bf16.mxu0 %v857
        %991 = vmatpush1.bf16.msra.mxu0 %v854
        %992 = vmatprep.subr.bf16.mxu0 0
        %993 = vmatpush1.bf16.msra.mxu0 0
        %994 = vmatprep.subr.bf16.mxu0 0
        %995 = vmatpush1.bf16.msra.mxu0 0
        %996 = vmatprep.subr.bf16.mxu0 0
        %997 = vmatpush1.bf16.msra.mxu0 0
        %998 = vmatprep.subr.bf16.mxu0 0
        %999 = vmatpush1.bf16.msra.mxu0 0
        %1000 = vmatprep.subr.bf16.mxu0 0
        %1001 = vmatpush1.bf16.msra.mxu0 0
        %1002 = vmatprep.subr.bf16.mxu0 0
        %1003 = vmatpush1.bf16.msra.mxu0 0
        %1004 = vmatprep.subr.bf16.mxu0 0
        %1005 = vmatpush1.bf16.msra.mxu0 0
        %1006 = vmatprep.subr.bf16.mxu0 0
        %1007 = vmatpush1.bf16.msra.mxu0 0
        %1008 = vmatprep.subr.bf16.mxu0 0
        %1009 = vmatpush1.bf16.msra.mxu0 0
        %1010 = vmatprep.subr.bf16.mxu0 0
        %1011 = vmatpush1.bf16.msra.mxu0 0
        %1012 = vmatprep.subr.bf16.mxu0 0
        %1013 = vmatpush1.bf16.msra.mxu0 0
        %1014 = vmatprep.mubr.bf16.mxu0 0
        %1015 = vmatmul.mubr.bf16.gmra.mrb[0].mxu0 %v832
        %v1016 = vpop.f32.mrb[0].mxu0
        %v1017 = vadd.f32 %v648, %v1016
        %v1018 = vpop.f32.mrb[0].mxu0
        %v1019 = vadd.f32 %v648, %v1018
        %v1020 = vpop.f32.mrb[0].mxu0
        %v1021 = vpop.f32.mrb[0].mxu0
        %1022 = vdwg.mxu0
        %1023 = vst [vmem:[%s202] sm:$0xff] %v894
        %1024 = vst [vmem:[%s202 + $0x8] sm:$0xff] %v896
        %1025 = vst [vmem:[%s202 + $0x10] sm:$0xff] %v935
        %1026 = vst [vmem:[%s202 + $0x18] sm:$0xff] %v937
        %1027 = vst [vmem:[%s202 + $0x20] sm:$0xff] %v976
        %1028 = vst [vmem:[%s202 + $0x28] sm:$0xff] %v978
        %1029 = vst [vmem:[%s202 + $0x30] sm:$0xff] %v1017
        %1030 = vst [vmem:[%s202 + $0x38] sm:$0xff] %v1019
        %s1031 = sand.u32 %s110, 1
        %s1032 = scalar_lea.sflag [#allocation5], %s1031
        %s1033 = sand.u32 %s110, 1
        %s1034 = smul.addr %s1033, 64
        %s1035 = scalar_lea.vmem [#allocation6], %s1034
        // Predicated region
        $region37: #{tpu_custom_call.1} parent=31 // pred_check
          %p1036 = pneg %p120
        $region38: #{tpu_custom_call.1} parent=31 // pred_check_branch
          %1038 = sbr.rel (%p1036) target = $region40
        $region39: #{tpu_custom_call.1} parent=31 // pred_region
          %s1039 = smul.u32 8, %s25
          %s1041 = ssub.s32 1024, 1024
          %1042 = vsyncadd %s1032, %s1041
          %s1043 = smul.addr %s24, 16
          %s1044 = sadd.s32 %s1039, %s1043
          %s1045 = smul.addr %s1044, 128
          %s1046 = scalar_lea.hbm %s3, %s1045
          %s1048 = sshll.u32 %s1035, 4
          %s1049 = int_to_ptr.vmem [resolvable:$true] %s1048
          %1051 = dma.vmem_to_hbm [thread:$0]  %s1049, 1024, %s1046, %s1032
        $region40: #{tpu_custom_call.1} parent=31 // pred_fallthru
          _
      $region32: #{tpu_custom_call.1} parent=5 // pred_fallthru
        _
      %p1052 = scmp.le.s32.totalorder 2, %s15
      // Predicated region
      $region41: #{tpu_custom_call.1} parent=5 // pred_check
        %p1053 = pneg %p1052
      $region42: #{tpu_custom_call.1} parent=5 // pred_check_branch
        %1055 = sbr.rel (%p1053) target = $region44
      $region43: #{tpu_custom_call.1} parent=5 // pred_region
        %s1056 = ssub.s32 %s15, 2
        // Predicated region
        $region45: #{tpu_custom_call.1} parent=43 // pred_check
          %p1057 = pneg %p126
        $region46: #{tpu_custom_call.1} parent=43 // pred_check_branch
          %1059 = sbr.rel (%p1057) target = $region48
        $region47: #{tpu_custom_call.1} parent=43 // pred_region
          %s1060 = sand.u32 %s111, 1
          %s1061 = scalar_lea.sflag [#allocation5], %s1060
          %s1062 = sand.u32 %s111, 1
          %s1063 = smul.addr %s1062, 64
          %s1064 = scalar_lea.vmem [#allocation6], %s1063
          %1065 = dma.done %s1061, 1024
        $region48: #{tpu_custom_call.1} parent=43 // pred_fallthru
          _
      $region44: #{tpu_custom_call.1} parent=5 // pred_fallthru
        _
    $region6: #{tpu_custom_call.1} parent=1 // loop_footer
      %s19 = sadd.s32 1, %s15
    $region7: #{tpu_custom_call.1} parent=1 // loop_footer_branch
      %14 = sbr.rel target = $region3
    $region8: #{tpu_custom_call.1} parent=1 // loop_exit
      _
    %1066 = vsyncpa [#allocation4], 1
    %s1067 = scalar_lea.sflag [#allocation4], 1
    %1068 = vsyncpa %s1067, 1
    %1069 = vsyncpa [#allocation5], 1
    %s1070 = scalar_lea.sflag [#allocation5], 1
    %1071 = vsyncpa %s1070, 1

</llo_original>
